<compile_context>
chip_gen: v7x
topology: tpu7x:2x2x1
jax: 0.10.0
libtpu: 0.0.40
codegen_flags: <defaults>
</compile_context>

<pallas_src>
import functools

import numpy as np

import jax
import jax.numpy as jnp
from jax.experimental import pallas as pl
from jax.experimental.pallas import tpu as pltpu

MXU_DTYPE = jnp.bfloat16   # matmul weight / input dtype (accumulation is f32)
LANE = 128                 # TPU lane width
TB_CAP = 512               # max batch rows per grid step


def _round_up(x, m):
    return (x + m - 1) // m * m


# ----------------------------------------------------------------------------
# Fused Pallas kernel: conv stack + recurrent cell + merged actor/critic heads
# ----------------------------------------------------------------------------
def _fused_kernel(img_ref, mem_ref, noise_ref, dir_ref,
                  w1, b1, w2, b2, w3, b3,
                  wih, whh, brnn,
                  wh1m, wh1o, wh1d, bh1, wh2, bh2,
                  logits_ref, value_ref, mem_out_ref, *, rgb, p1pad):
    """One row-block of the full RecACModel forward.

    conv: pool(relu(conv1)) == relu(max_i(x @ W1_i) + b1); the 4 pooled-column
    variants W1_i are pre-concatenated into `w1`, so conv1 is ONE matmul and a
    max over 4 lane-aligned column groups.  conv2/conv3 are plain matmuls.
    """
    x = img_ref[...]                                   # (TB, KPAD) f32
    if rgb:
        x = x * jnp.float32(1.0 / 255.0)
    xc = x.astype(MXU_DTYPE)

    # conv1 + ReLU + MaxPool2x2 (folded) -------------------------------------
    z4 = jnp.dot(xc, w1[...], preferred_element_type=jnp.float32)   # (TB, 4*P1PAD)
    z = jnp.maximum(jnp.maximum(z4[:, 0 * p1pad:1 * p1pad],
                                z4[:, 1 * p1pad:2 * p1pad]),
                    jnp.maximum(z4[:, 2 * p1pad:3 * p1pad],
                                z4[:, 3 * p1pad:4 * p1pad]))
    h = jnp.maximum(z + b1[...], 0.0)                  # (TB, P1PAD)

    # conv2 + ReLU, conv3 + ReLU ----------------------------------------------
    h = jnp.maximum(jnp.dot(h.astype(MXU_DTYPE), w2[...],
                            preferred_element_type=jnp.float32) + b2[...], 0.0)
    feat = jnp.maximum(jnp.dot(h.astype(MXU_DTYPE), w3[...],
                               preferred_element_type=jnp.float32) + b3[...], 0.0)
    featc = feat.astype(MXU_DTYPE)                     # (TB, FPAD)

    # recurrent cell stand-in (noisy tanh RNN), f32 pre-activation ------------
    memc = mem_ref[...].astype(MXU_DTYPE)              # (TB, MEMPAD)
    pre = (jnp.dot(featc, wih[...], preferred_element_type=jnp.float32)
           + jnp.dot(memc, whh[...], preferred_element_type=jnp.float32)
           + brnn[...] + noise_ref[...])
    new_mem = jnp.tanh(pre)                            # padded lanes stay 0
    mem_out_ref[...] = new_mem
    new_memc = new_mem.astype(MXU_DTYPE)

    # merged actor|critic heads: layer-1 and layer-2 are single N=256 matmuls.
    # embedding @ W1 is decomposed into [obs | memory | direction] blocks
    # (unused blocks are zero weights), so no in-kernel concatenation.
    d = dir_ref[...]                                   # (TB, 1) f32
    h = jnp.tanh(jnp.dot(new_memc, wh1m[...], preferred_element_type=jnp.float32)
                 + jnp.dot(featc, wh1o[...], preferred_element_type=jnp.float32)
                 + d * wh1d[...] + bh1[...])           # (TB, 256)
    out = jnp.dot(h.astype(MXU_DTYPE), wh2[...],
                  preferred_element_type=jnp.float32) + bh2[...]     # (TB, 256)

    # lanes [0:128]  -> actor logits (action mask baked into bh2 as -1e30)
    # lanes [128:256]-> critic block (value at lane 0 of the block)
    logits = out[:, :LANE]
    m = jnp.max(logits, axis=-1, keepdims=True)
    lse = m + jnp.log(jnp.sum(jnp.exp(logits - m), axis=-1, keepdims=True))
    logits_ref[...] = logits - lse
    value_ref[...] = out[:, LANE:]


# ----------------------------------------------------------------------------
# pallas_call wrapper
# ----------------------------------------------------------------------------
def _row_spec(tb, arr):
    return pl.BlockSpec((tb, arr.shape[1]), lambda i: (i, 0))


def _full_spec(arr):
    return pl.BlockSpec(arr.shape, lambda i: (0, 0))


def _fused_call(p, img, mem, nz, dr, tb, cfg):
    bp = img.shape[0]
    mempad = mem.shape[1]
    names = ("conv_w1", "conv_b1", "conv_w2", "conv_b2", "conv_w3", "conv_b3",
             "wih", "whh", "brnn",
             "wh1m", "wh1o", "wh1d", "bh1", "wh2", "bh2")
    weights = [p[k] for k in names]
    return pl.pallas_call(
        functools.partial(_fused_kernel, rgb=cfg["rgb"], p1pad=cfg["P1PAD"]),
        out_shape=(jax.ShapeDtypeStruct((bp, LANE), jnp.float32),
                   jax.ShapeDtypeStruct((bp, LANE), jnp.float32),
                   jax.ShapeDtypeStruct((bp, mempad), jnp.float32)),
        grid=(bp // tb,),
        in_specs=[_row_spec(tb, img), _row_spec(tb, mem),
                  _row_spec(tb, nz), _row_spec(tb, dr)]
                 + [_full_spec(w) for w in weights],
        out_specs=(pl.BlockSpec((tb, LANE), lambda i: (i, 0)),
                   pl.BlockSpec((tb, LANE), lambda i: (i, 0)),
                   pl.BlockSpec((tb, mempad), lambda i: (i, 0))),
        compiler_params=pltpu.CompilerParams(
            dimension_semantics=("parallel",)),
    )(img, mem, nz, dr, *weights)


# ----------------------------------------------------------------------------
# Parameter construction (init-time "layout plumbing": conv -> dense matmul,
# pooling folded into conv1, lane-dense / K-aligned zero padding, bf16 weights)
# ----------------------------------------------------------------------------
def _conv2x2_dense(w, H, W):
    """2x2 stride-1 conv as a dense (H*W*Cin, (H-1)*(W-1)*Cout) matrix acting
    on NHWC-flattened inputs / producing NHWC-flattened outputs."""
    cin, cout = w.shape[2], w.shape[3]
    OH, OW = H - 1, W - 1
    M = np.zeros((H * W * cin, OH * OW * cout), np.float32)
    for oy in range(OH):
        for ox in range(OW):
            c0 = (oy * OW + ox) * cout
            for ki in range(2):
                for kj in range(2):
                    r0 = ((oy + ki) * W + (ox + kj)) * cin
                    M[r0:r0 + cin, c0:c0 + cout] = w[ki, kj]
    return M


def _pool_cols(OH, OW, C, di, dj):
    """Columns of the conv1 output selected by max-pool window offset (di,dj)."""
    PH, PW = OH // 2, OW // 2
    cols = []
    for p in range(PH):
        for q in range(PW):
            base = ((2 * p + di) * OW + (2 * q + dj)) * C
            cols.extend(range(base, base + C))
    return np.asarray(cols, np.int64)


def _conv_init(key, cin, cout):
    """torch Conv2d default init: uniform(+-1/sqrt(fan_in))."""
    fan_in = 2 * 2 * cin
    bound = 1.0 / np.sqrt(fan_in)
    kw, kb = jax.random.split(key)
    w = np.asarray(jax.random.uniform(kw, (2, 2, cin, cout), jnp.float32,
                                      -bound, bound))
    b = np.asarray(jax.random.uniform(kb, (cout,), jnp.float32, -bound, bound))
    return w, b


def _linear_init(key, fan_out, fan_in):
    """init_params: N(0,1) weight, L2-normalized per output row, zero bias."""
    w = np.asarray(jax.random.normal(key, (fan_out, fan_in), jnp.float32))
    w = w / np.sqrt((w * w).sum(axis=1, keepdims=True))
    return w  # torch layout (out, in)


def make_params(key, n, m, act_dim, memory_size=300,
                with_obs=False, with_HD=False, rgb=True):
    assert act_dim <= LANE
    ks = jax.random.split(key, 9)

    # ---- conv stack ---------------------------------------------------------
    w1, b1 = _conv_init(ks[0], 3, 16)
    w2, b2 = _conv_init(ks[1], 16, 32)
    w3, b3 = _conv_init(ks[2], 32, 64)

    K = n * m * 3
    KPAD = _round_up(K, LANE)
    OH1, OW1 = n - 1, m - 1
    PH, PW = OH1 // 2, OW1 // 2
    P1 = PH * PW * 16
    P1PAD = _round_up(P1, LANE)
    OH2, OW2 = PH - 1, PW - 1
    C2 = OH2 * OW2 * 32
    C2PAD = _round_up(C2, LANE)
    OH3, OW3 = OH2 - 1, OW2 - 1
    F = OH3 * OW3 * 64
    FPAD = _round_up(F, LANE)
    assert F == ((n - 1) // 2 - 2) * ((m - 1) // 2 - 2) * 64

    # conv1 + folded max-pool: 4 pooled-column variants concatenated, each
    # zero-padded to P1PAD lanes so the in-kernel max uses 128-aligned slices.
    M1 = _conv2x2_dense(w1, n, m)                         # (K, OH1*OW1*16)
    W1cat = np.zeros((KPAD, 4 * P1PAD), np.float32)
    for idx, (di, dj) in enumerate(((0, 0), (0, 1), (1, 0), (1, 1))):
        W1cat[:K, idx * P1PAD:idx * P1PAD + P1] = M1[:, _pool_cols(OH1, OW1, 16, di, dj)]
    b1f = np.zeros((1, P1PAD), np.float32)
    b1f[0, :P1] = np.tile(b1, PH * PW)

    M2 = _conv2x2_dense(w2, PH, PW)                       # (P1, C2)
    W2p = np.zeros((P1PAD, C2PAD), np.float32); W2p[:P1, :C2] = M2
    b2f = np.zeros((1, C2PAD), np.float32)
    b2f[0, :C2] = np.tile(b2, OH2 * OW2)

    M3 = _conv2x2_dense(w3, OH2, OW2)                     # (C2, F)
    W3p = np.zeros((C2PAD, FPAD), np.float32); W3p[:C2, :F] = M3
    b3f = np.zeros((1, FPAD), np.float32)
    b3f[0, :F] = np.tile(b3, OH3 * OW3)

    # ---- recurrent cell stand-in (consumes the NHWC-flattened feature; this
    # is a row permutation of the torch NCHW ordering, applied at init).
    # memory_size padded to a multiple of 128 so mem blocks are lane-dense;
    # padded rows/cols are exactly zero so padded lanes stay tanh(0)=0. -------
    MEM = memory_size
    MEMPAD = _round_up(MEM, LANE)
    wih_t = _linear_init(ks[3], MEM, F)                   # (mem, F)
    whh_t = _linear_init(ks[4], MEM, MEM)
    Wih = np.zeros((FPAD, MEMPAD), np.float32); Wih[:F, :MEM] = wih_t.T
    Whh = np.zeros((MEMPAD, MEMPAD), np.float32); Whh[:MEM, :MEM] = whh_t.T
    brnn = np.zeros((1, MEMPAD), np.float32)

    # ---- merged actor|critic heads -----------------------------------------
    embedding_size = (F if with_obs else 0) + MEM + (1 if with_HD else 0)

    def split_head_w(k_, out_dim):
        wfull = _linear_init(k_, out_dim, embedding_size)  # (out, emb)
        col = 0
        if with_obs:
            wobs = wfull[:, col:col + F]; col += F
        else:
            wobs = np.zeros((out_dim, F), np.float32)
        wmem = wfull[:, col:col + MEM]; col += MEM
        if with_HD:
            wdir = wfull[:, col:col + 1]; col += 1
        else:
            wdir = np.zeros((out_dim, 1), np.float32)
        assert col == embedding_size
        return wobs, wmem, wdir

    wa_obs, wa_mem, wa_dir = split_head_w(ks[5], 64)      # actor layer 1
    wc_obs, wc_mem, wc_dir = split_head_w(ks[7], 64)      # critic layer 1

    H2 = 2 * LANE  # merged hidden width: actor lanes [0:64], critic [128:192]
    Wh1m = np.zeros((MEMPAD, H2), np.float32)
    Wh1m[:MEM, 0:64] = wa_mem.T
    Wh1m[:MEM, LANE:LANE + 64] = wc_mem.T
    Wh1o = np.zeros((FPAD, H2), np.float32)
    Wh1o[:F, 0:64] = wa_obs.T
    Wh1o[:F, LANE:LANE + 64] = wc_obs.T
    Wh1d = np.zeros((1, H2), np.float32)
    Wh1d[0, 0:64] = wa_dir[:, 0]
    Wh1d[0, LANE:LANE + 64] = wc_dir[:, 0]
    bh1 = np.zeros((1, H2), np.float32)

    wa2_t = _linear_init(ks[6], act_dim, 64)              # (act_dim, 64)
    wc2_t = _linear_init(ks[8], 1, 64)                    # (1, 64)
    Wh2 = np.zeros((H2, H2), np.float32)
    Wh2[0:64, 0:act_dim] = wa2_t.T                        # actor logits lanes [0:act_dim]
    Wh2[LANE:LANE + 64, LANE:LANE + 1] = wc2_t.T          # value at lane 128
    bh2 = np.zeros((1, H2), np.float32)
    bh2[0, act_dim:LANE] = -1e30                          # action mask baked in

    mxu = lambda a: jnp.asarray(a, MXU_DTYPE)             # matmul weights: bf16
    f32 = lambda a: jnp.asarray(a, jnp.float32)           # biases / rank-1: f32
    return {
        "cfg": dict(n=n, m=m, act_dim=act_dim, memory_size=MEM, rgb=rgb,
                    with_obs=with_obs, with_HD=with_HD,
                    F=F, FPAD=FPAD, KPAD=KPAD, P1PAD=P1PAD, MEMPAD=MEMPAD),
        "conv_w1": mxu(W1cat), "conv_b1": f32(b1f),
        "conv_w2": mxu(W2p), "conv_b2": f32(b2f),
        "conv_w3": mxu(W3p), "conv_b3": f32(b3f),
        "wih": mxu(Wih), "whh": mxu(Whh), "brnn": f32(brnn),
        "wh1m": mxu(Wh1m), "wh1o": mxu(Wh1o), "wh1d": f32(Wh1d), "bh1": f32(bh1),
        "wh2": mxu(Wh2), "bh2": f32(bh2),
    }


# ----------------------------------------------------------------------------
# Forward pass
# ----------------------------------------------------------------------------
def rec_ac_forward(params, image, direction, memory, noise):
    """image: (B, n, m, 3) HWC obs; direction: (B,); memory/noise: (B, mem).
    Returns (log_probs, value, new_memory)."""
    cfg = params["cfg"]
    B = image.shape[0]
    MEM, MEMPAD, KPAD = cfg["memory_size"], cfg["MEMPAD"], cfg["KPAD"]

    tb = min(_round_up(B, 8), TB_CAP)
    if B > 8:                                   # >=2 grid steps when possible
        tb = min(tb, _round_up((B + 1) // 2, 8))  # feeds both v7x TensorCores
    bp = _round_up(B, tb)

    def pad(a, cols):
        return jnp.pad(a, ((0, bp - B), (0, cols - a.shape[1])))

    img = pad(image.reshape(B, -1).astype(jnp.float32), KPAD)   # NHWC flatten
    mem = pad(memory.astype(jnp.float32), MEMPAD)
    nz = pad(noise.astype(jnp.float32), MEMPAD)
    dr = pad(direction.astype(jnp.float32).reshape(B, 1), 1)

    logits_p, value_p, mem_p = _fused_call(params, img, mem, nz, dr, tb, cfg)

    log_probs = logits_p[:B, :cfg["act_dim"]]
    value = value_p[:B, 0]
    new_memory = mem_p[:B, :MEM]
    return log_probs, value, new_memory


if __name__ == "__main__":
    key = jax.random.PRNGKey(0)
    pkey, ikey, dkey, mkey, nkey = jax.random.split(key, 5)

    B, n, m = 2, 7, 7          # minigrid-style obs_space['image'] = (7, 7, 3)
    act_dim = 4
    memory_size = 300

    params = make_params(pkey, n, m, act_dim, memory_size=memory_size,
                         with_obs=False, with_HD=True, rgb=True)

    image = jax.random.randint(ikey, (B, n, m, 3), 0, 256).astype(jnp.float32)
    direction = jax.random.randint(dkey, (B,), 0, 4).astype(jnp.float32)
    memory = jax.random.normal(mkey, (B, memory_size), jnp.float32)
    noise = 0.1 * jax.random.normal(nkey, (B, memory_size), jnp.float32)

    fwd = jax.jit(functools.partial(rec_ac_forward, params))
    log_probs, value, new_memory = fwd(image, direction, memory, noise)
    jax.block_until_ready((log_probs, value, new_memory))

    assert log_probs.shape == (B, act_dim)
    assert value.shape == (B,)
    assert new_memory.shape == (B, memory_size)
    assert bool(jnp.all(jnp.isfinite(log_probs)))
    assert bool(jnp.all(jnp.isfinite(value)))
    assert bool(jnp.all(jnp.isfinite(new_memory)))
    assert bool(jnp.allclose(jnp.sum(jnp.exp(log_probs), axis=-1), 1.0, atol=1e-3))
    print("KERNEL_OK")
</pallas_src>

<mosaic_0001>
module attributes {stable_mosaic.version = 11 : i64} {
  func.func @_fused_kernel(%arg0: i32, %arg1: memref<8x256xf32, #tpu.memory_space<vmem>>, %arg2: memref<8x384xf32, #tpu.memory_space<vmem>>, %arg3: memref<8x384xf32, #tpu.memory_space<vmem>>, %arg4: memref<8x1xf32, #tpu.memory_space<vmem>>, %arg5: memref<256x1024xbf16, #tpu.memory_space<vmem>>, %arg6: memref<1x256xf32, #tpu.memory_space<vmem>>, %arg7: memref<256x128xbf16, #tpu.memory_space<vmem>>, %arg8: memref<1x128xf32, #tpu.memory_space<vmem>>, %arg9: memref<128x128xbf16, #tpu.memory_space<vmem>>, %arg10: memref<1x128xf32, #tpu.memory_space<vmem>>, %arg11: memref<128x384xbf16, #tpu.memory_space<vmem>>, %arg12: memref<384x384xbf16, #tpu.memory_space<vmem>>, %arg13: memref<1x384xf32, #tpu.memory_space<vmem>>, %arg14: memref<384x256xbf16, #tpu.memory_space<vmem>>, %arg15: memref<128x256xbf16, #tpu.memory_space<vmem>>, %arg16: memref<1x256xf32, #tpu.memory_space<vmem>>, %arg17: memref<1x256xf32, #tpu.memory_space<vmem>>, %arg18: memref<256x256xbf16, #tpu.memory_space<vmem>>, %arg19: memref<1x256xf32, #tpu.memory_space<vmem>>, %arg20: memref<8x128xf32, #tpu.memory_space<vmem>>, %arg21: memref<8x128xf32, #tpu.memory_space<vmem>>, %arg22: memref<8x384xf32, #tpu.memory_space<vmem>>) attributes {dimension_semantics = [#tpu.dimension_semantics<parallel>], iteration_bounds = array<i64: 1>, scalar_prefetch = 0 : i64, scratch_operands = 0 : i64, tpu.core_type = #tpu.core_type<tc>, window_params = [{transform_indices = @transform_0, window_bounds = array<i64: 8, 256>}, {transform_indices = @transform_1, window_bounds = array<i64: 8, 384>}, {transform_indices = @transform_2, window_bounds = array<i64: 8, 384>}, {transform_indices = @transform_3, window_bounds = array<i64: 8, 1>}, {pipeline_mode = #tpu.pipeline_mode<synchronous>, transform_indices = @transform_4, window_bounds = array<i64: 256, 1024>}, {pipeline_mode = #tpu.pipeline_mode<synchronous>, transform_indices = @transform_5, window_bounds = array<i64: 1, 256>}, {pipeline_mode = #tpu.pipeline_mode<synchronous>, transform_indices = @transform_6, window_bounds = array<i64: 256, 128>}, {pipeline_mode = #tpu.pipeline_mode<synchronous>, transform_indices = @transform_7, window_bounds = array<i64: 1, 128>}, {pipeline_mode = #tpu.pipeline_mode<synchronous>, transform_indices = @transform_8, window_bounds = array<i64: 128, 128>}, {pipeline_mode = #tpu.pipeline_mode<synchronous>, transform_indices = @transform_9, window_bounds = array<i64: 1, 128>}, {pipeline_mode = #tpu.pipeline_mode<synchronous>, transform_indices = @transform_10, window_bounds = array<i64: 128, 384>}, {pipeline_mode = #tpu.pipeline_mode<synchronous>, transform_indices = @transform_11, window_bounds = array<i64: 384, 384>}, {pipeline_mode = #tpu.pipeline_mode<synchronous>, transform_indices = @transform_12, window_bounds = array<i64: 1, 384>}, {pipeline_mode = #tpu.pipeline_mode<synchronous>, transform_indices = @transform_13, window_bounds = array<i64: 384, 256>}, {pipeline_mode = #tpu.pipeline_mode<synchronous>, transform_indices = @transform_14, window_bounds = array<i64: 128, 256>}, {pipeline_mode = #tpu.pipeline_mode<synchronous>, transform_indices = @transform_15, window_bounds = array<i64: 1, 256>}, {pipeline_mode = #tpu.pipeline_mode<synchronous>, transform_indices = @transform_16, window_bounds = array<i64: 1, 256>}, {pipeline_mode = #tpu.pipeline_mode<synchronous>, transform_indices = @transform_17, window_bounds = array<i64: 256, 256>}, {pipeline_mode = #tpu.pipeline_mode<synchronous>, transform_indices = @transform_18, window_bounds = array<i64: 1, 256>}, {transform_indices = @transform_19, window_bounds = array<i64: 8, 128>}, {transform_indices = @transform_20, window_bounds = array<i64: 8, 128>}, {transform_indices = @transform_21, window_bounds = array<i64: 8, 384>}]} {
    %c0 = arith.constant 0 : index
    %c0_0 = arith.constant 0 : index
    %0 = vector.load %arg1[%c0, %c0_0] : memref<8x256xf32, #tpu.memory_space<vmem>>, vector<8x256xf32>
    %cst = arith.constant 0.00392156886 : f32
    %1 = vector.broadcast %cst : f32 to vector<8x256xf32>
    %2 = arith.mulf %0, %1 : vector<8x256xf32>
    %3 = arith.truncf %2 : vector<8x256xf32> to vector<8x256xbf16>
    %c0_1 = arith.constant 0 : index
    %c0_2 = arith.constant 0 : index
    %4 = vector.load %arg5[%c0_1, %c0_2] : memref<256x1024xbf16, #tpu.memory_space<vmem>>, vector<256x1024xbf16>
    %cst_3 = arith.constant dense<0.000000e+00> : vector<8x1024xf32>
    %5 = tpu.matmul %3, %4, %cst_3 {dimension_numbers = #tpu.dot_dimension_numbers<[1], [0], [0], [1], [0, 0, 1, 1], [], []>} : vector<8x256xbf16>, vector<256x1024xbf16>, vector<8x1024xf32> -> vector<8x1024xf32>
    %6 = vector.extract_strided_slice %5 {offsets = [0, 0], sizes = [8, 256], strides = [1, 1]} : vector<8x1024xf32> to vector<8x256xf32>
    %7 = vector.extract_strided_slice %5 {offsets = [0, 256], sizes = [8, 256], strides = [1, 1]} : vector<8x1024xf32> to vector<8x256xf32>
    %8 = arith.maximumf %6, %7 : vector<8x256xf32>
    %9 = vector.extract_strided_slice %5 {offsets = [0, 512], sizes = [8, 256], strides = [1, 1]} : vector<8x1024xf32> to vector<8x256xf32>
    %10 = vector.extract_strided_slice %5 {offsets = [0, 768], sizes = [8, 256], strides = [1, 1]} : vector<8x1024xf32> to vector<8x256xf32>
    %11 = arith.maximumf %9, %10 : vector<8x256xf32>
    %12 = arith.maximumf %8, %11 : vector<8x256xf32>
    %c0_4 = arith.constant 0 : index
    %c0_5 = arith.constant 0 : index
    %13 = vector.load %arg6[%c0_4, %c0_5] : memref<1x256xf32, #tpu.memory_space<vmem>>, vector<1x256xf32>
    %14 = vector.broadcast %13 : vector<1x256xf32> to vector<8x256xf32>
    %15 = arith.addf %12, %14 : vector<8x256xf32>
    %cst_6 = arith.constant 0.000000e+00 : f32
    %16 = vector.broadcast %cst_6 : f32 to vector<8x256xf32>
    %17 = arith.maximumf %15, %16 : vector<8x256xf32>
    %18 = arith.truncf %17 : vector<8x256xf32> to vector<8x256xbf16>
    %c0_7 = arith.constant 0 : index
    %c0_8 = arith.constant 0 : index
    %19 = vector.load %arg7[%c0_7, %c0_8] : memref<256x128xbf16, #tpu.memory_space<vmem>>, vector<256x128xbf16>
    %cst_9 = arith.constant dense<0.000000e+00> : vector<8x128xf32>
    %20 = tpu.matmul %18, %19, %cst_9 {dimension_numbers = #tpu.dot_dimension_numbers<[1], [0], [0], [1], [0, 0, 1, 1], [], []>} : vector<8x256xbf16>, vector<256x128xbf16>, vector<8x128xf32> -> vector<8x128xf32>
    %c0_10 = arith.constant 0 : index
    %c0_11 = arith.constant 0 : index
    %21 = vector.load %arg8[%c0_10, %c0_11] : memref<1x128xf32, #tpu.memory_space<vmem>>, vector<1x128xf32>
    %22 = vector.broadcast %21 : vector<1x128xf32> to vector<8x128xf32>
    %23 = arith.addf %20, %22 : vector<8x128xf32>
    %cst_12 = arith.constant 0.000000e+00 : f32
    %24 = vector.broadcast %cst_12 : f32 to vector<8x128xf32>
    %25 = arith.maximumf %23, %24 : vector<8x128xf32>
    %26 = arith.truncf %25 : vector<8x128xf32> to vector<8x128xbf16>
    %c0_13 = arith.constant 0 : index
    %c0_14 = arith.constant 0 : index
    %27 = vector.load %arg9[%c0_13, %c0_14] : memref<128x128xbf16, #tpu.memory_space<vmem>>, vector<128x128xbf16>
    %cst_15 = arith.constant dense<0.000000e+00> : vector<8x128xf32>
    %28 = tpu.matmul %26, %27, %cst_15 {dimension_numbers = #tpu.dot_dimension_numbers<[1], [0], [0], [1], [0, 0, 1, 1], [], []>} : vector<8x128xbf16>, vector<128x128xbf16>, vector<8x128xf32> -> vector<8x128xf32>
    %c0_16 = arith.constant 0 : index
    %c0_17 = arith.constant 0 : index
    %29 = vector.load %arg10[%c0_16, %c0_17] : memref<1x128xf32, #tpu.memory_space<vmem>>, vector<1x128xf32>
    %30 = vector.broadcast %29 : vector<1x128xf32> to vector<8x128xf32>
    %31 = arith.addf %28, %30 : vector<8x128xf32>
    %cst_18 = arith.constant 0.000000e+00 : f32
    %32 = vector.broadcast %cst_18 : f32 to vector<8x128xf32>
    %33 = arith.maximumf %31, %32 : vector<8x128xf32>
    %34 = arith.truncf %33 : vector<8x128xf32> to vector<8x128xbf16>
    %c0_19 = arith.constant 0 : index
    %c0_20 = arith.constant 0 : index
    %35 = vector.load %arg2[%c0_19, %c0_20] : memref<8x384xf32, #tpu.memory_space<vmem>>, vector<8x384xf32>
    %36 = arith.truncf %35 : vector<8x384xf32> to vector<8x384xbf16>
    %c0_21 = arith.constant 0 : index
    %c0_22 = arith.constant 0 : index
    %37 = vector.load %arg11[%c0_21, %c0_22] : memref<128x384xbf16, #tpu.memory_space<vmem>>, vector<128x384xbf16>
    %cst_23 = arith.constant dense<0.000000e+00> : vector<8x384xf32>
    %38 = tpu.matmul %34, %37, %cst_23 {dimension_numbers = #tpu.dot_dimension_numbers<[1], [0], [0], [1], [0, 0, 1, 1], [], []>} : vector<8x128xbf16>, vector<128x384xbf16>, vector<8x384xf32> -> vector<8x384xf32>
    %c0_24 = arith.constant 0 : index
    %c0_25 = arith.constant 0 : index
    %39 = vector.load %arg12[%c0_24, %c0_25] : memref<384x384xbf16, #tpu.memory_space<vmem>>, vector<384x384xbf16>
    %cst_26 = arith.constant dense<0.000000e+00> : vector<8x384xf32>
    %40 = tpu.matmul %36, %39, %cst_26 {dimension_numbers = #tpu.dot_dimension_numbers<[1], [0], [0], [1], [0, 0, 1, 1], [], []>} : vector<8x384xbf16>, vector<384x384xbf16>, vector<8x384xf32> -> vector<8x384xf32>
    %41 = arith.addf %38, %40 : vector<8x384xf32>
    %c0_27 = arith.constant 0 : index
    %c0_28 = arith.constant 0 : index
    %42 = vector.load %arg13[%c0_27, %c0_28] : memref<1x384xf32, #tpu.memory_space<vmem>>, vector<1x384xf32>
    %43 = vector.broadcast %42 : vector<1x384xf32> to vector<8x384xf32>
    %44 = arith.addf %41, %43 : vector<8x384xf32>
    %c0_29 = arith.constant 0 : index
    %c0_30 = arith.constant 0 : index
    %45 = vector.load %arg3[%c0_29, %c0_30] : memref<8x384xf32, #tpu.memory_space<vmem>>, vector<8x384xf32>
    %46 = arith.addf %44, %45 : vector<8x384xf32>
    %47 = math.tanh %46 : vector<8x384xf32>
    %c0_31 = arith.constant 0 : index
    %c0_32 = arith.constant 0 : index
    %48 = vector.load %arg22[%c0_31, %c0_32] : memref<8x384xf32, #tpu.memory_space<vmem>>, vector<8x384xf32>
    tpu.vector_store %arg22[%c0_31, %c0_32], %47 {strides = array<i32>} : memref<8x384xf32, #tpu.memory_space<vmem>>, vector<8x384xf32>,
    %49 = arith.truncf %47 : vector<8x384xf32> to vector<8x384xbf16>
    %c0_33 = arith.constant 0 : index
    %c0_34 = arith.constant 0 : index
    %50 = vector.load %arg4[%c0_33, %c0_34] : memref<8x1xf32, #tpu.memory_space<vmem>>, vector<8x1xf32>
    %c0_35 = arith.constant 0 : index
    %c0_36 = arith.constant 0 : index
    %51 = vector.load %arg14[%c0_35, %c0_36] : memref<384x256xbf16, #tpu.memory_space<vmem>>, vector<384x256xbf16>
    %cst_37 = arith.constant dense<0.000000e+00> : vector<8x256xf32>
    %52 = tpu.matmul %49, %51, %cst_37 {dimension_numbers = #tpu.dot_dimension_numbers<[1], [0], [0], [1], [0, 0, 1, 1], [], []>} : vector<8x384xbf16>, vector<384x256xbf16>, vector<8x256xf32> -> vector<8x256xf32>
    %c0_38 = arith.constant 0 : index
    %c0_39 = arith.constant 0 : index
    %53 = vector.load %arg15[%c0_38, %c0_39] : memref<128x256xbf16, #tpu.memory_space<vmem>>, vector<128x256xbf16>
    %cst_40 = arith.constant dense<0.000000e+00> : vector<8x256xf32>
    %54 = tpu.matmul %34, %53, %cst_40 {dimension_numbers = #tpu.dot_dimension_numbers<[1], [0], [0], [1], [0, 0, 1, 1], [], []>} : vector<8x128xbf16>, vector<128x256xbf16>, vector<8x256xf32> -> vector<8x256xf32>
    %55 = arith.addf %52, %54 : vector<8x256xf32>
    %c0_41 = arith.constant 0 : index
    %c0_42 = arith.constant 0 : index
    %56 = vector.load %arg16[%c0_41, %c0_42] : memref<1x256xf32, #tpu.memory_space<vmem>>, vector<1x256xf32>
    %57 = vector.broadcast %50 : vector<8x1xf32> to vector<8x256xf32>
    %58 = vector.broadcast %56 : vector<1x256xf32> to vector<8x256xf32>
    %59 = arith.mulf %57, %58 : vector<8x256xf32>
    %60 = arith.addf %55, %59 : vector<8x256xf32>
    %c0_43 = arith.constant 0 : index
    %c0_44 = arith.constant 0 : index
    %61 = vector.load %arg17[%c0_43, %c0_44] : memref<1x256xf32, #tpu.memory_space<vmem>>, vector<1x256xf32>
    %62 = vector.broadcast %61 : vector<1x256xf32> to vector<8x256xf32>
    %63 = arith.addf %60, %62 : vector<8x256xf32>
    %64 = math.tanh %63 : vector<8x256xf32>
    %65 = arith.truncf %64 : vector<8x256xf32> to vector<8x256xbf16>
    %c0_45 = arith.constant 0 : index
    %c0_46 = arith.constant 0 : index
    %66 = vector.load %arg18[%c0_45, %c0_46] : memref<256x256xbf16, #tpu.memory_space<vmem>>, vector<256x256xbf16>
    %cst_47 = arith.constant dense<0.000000e+00> : vector<8x256xf32>
    %67 = tpu.matmul %65, %66, %cst_47 {dimension_numbers = #tpu.dot_dimension_numbers<[1], [0], [0], [1], [0, 0, 1, 1], [], []>} : vector<8x256xbf16>, vector<256x256xbf16>, vector<8x256xf32> -> vector<8x256xf32>
    %c0_48 = arith.constant 0 : index
    %c0_49 = arith.constant 0 : index
    %68 = vector.load %arg19[%c0_48, %c0_49] : memref<1x256xf32, #tpu.memory_space<vmem>>, vector<1x256xf32>
    %69 = vector.broadcast %68 : vector<1x256xf32> to vector<8x256xf32>
    %70 = arith.addf %67, %69 : vector<8x256xf32>
    %71 = vector.extract_strided_slice %70 {offsets = [0, 0], sizes = [8, 128], strides = [1, 1]} : vector<8x256xf32> to vector<8x128xf32>
    %cst_50 = arith.constant dense<0xFF800000> : vector<8xf32>
    %72 = vector.multi_reduction <maximumf>, %71, %cst_50 [1] : vector<8x128xf32> to vector<8xf32>
    %73 = vector.shape_cast %72 : vector<8xf32> to vector<8x1xf32>
    %74 = vector.broadcast %73 : vector<8x1xf32> to vector<8x128xf32>
    %75 = arith.subf %71, %74 : vector<8x128xf32>
    %76 = math.exp %75 : vector<8x128xf32>
    %cst_51 = arith.constant dense<0.000000e+00> : vector<8xf32>
    %77 = vector.multi_reduction <add>, %76, %cst_51 [1] : vector<8x128xf32> to vector<8xf32>
    %78 = vector.shape_cast %77 : vector<8xf32> to vector<8x1xf32>
    %79 = math.log %78 : vector<8x1xf32>
    %80 = arith.addf %73, %79 : vector<8x1xf32>
    %81 = vector.broadcast %80 : vector<8x1xf32> to vector<8x128xf32>
    %82 = arith.subf %71, %81 : vector<8x128xf32>
    %c0_52 = arith.constant 0 : index
    %c0_53 = arith.constant 0 : index
    %83 = vector.load %arg20[%c0_52, %c0_53] : memref<8x128xf32, #tpu.memory_space<vmem>>, vector<8x128xf32>
    tpu.vector_store %arg20[%c0_52, %c0_53], %82 {strides = array<i32>} : memref<8x128xf32, #tpu.memory_space<vmem>>, vector<8x128xf32>,
    %84 = vector.extract_strided_slice %70 {offsets = [0, 128], sizes = [8, 128], strides = [1, 1]} : vector<8x256xf32> to vector<8x128xf32>
    %c0_54 = arith.constant 0 : index
    %c0_55 = arith.constant 0 : index
    %85 = vector.load %arg21[%c0_54, %c0_55] : memref<8x128xf32, #tpu.memory_space<vmem>>, vector<8x128xf32>
    tpu.vector_store %arg21[%c0_54, %c0_55], %84 {strides = array<i32>} : memref<8x128xf32, #tpu.memory_space<vmem>>, vector<8x128xf32>,
    return
  }
  func.func @transform_0(%arg0: i32) -> (i32, i32) {
    %c0_i32 = arith.constant 0 : i32
    %c0_i32_0 = arith.constant 0 : i32
    return %arg0, %c0_i32 : i32, i32
  }
  func.func @transform_1(%arg0: i32) -> (i32, i32) {
    %c0_i32 = arith.constant 0 : i32
    %c0_i32_0 = arith.constant 0 : i32
    return %arg0, %c0_i32 : i32, i32
  }
  func.func @transform_2(%arg0: i32) -> (i32, i32) {
    %c0_i32 = arith.constant 0 : i32
    %c0_i32_0 = arith.constant 0 : i32
    return %arg0, %c0_i32 : i32, i32
  }
  func.func @transform_3(%arg0: i32) -> (i32, i32) {
    %c0_i32 = arith.constant 0 : i32
    %c0_i32_0 = arith.constant 0 : i32
    return %arg0, %c0_i32 : i32, i32
  }
  func.func @transform_4(%arg0: i32) -> (i32, i32) {
    %c0_i32 = arith.constant 0 : i32
    %c0_i32_0 = arith.constant 0 : i32
    %c0_i32_1 = arith.constant 0 : i32
    return %c0_i32, %c0_i32_0 : i32, i32
  }
  func.func @transform_5(%arg0: i32) -> (i32, i32) {
    %c0_i32 = arith.constant 0 : i32
    %c0_i32_0 = arith.constant 0 : i32
    %c0_i32_1 = arith.constant 0 : i32
    return %c0_i32, %c0_i32_0 : i32, i32
  }
  func.func @transform_6(%arg0: i32) -> (i32, i32) {
    %c0_i32 = arith.constant 0 : i32
    %c0_i32_0 = arith.constant 0 : i32
    %c0_i32_1 = arith.constant 0 : i32
    return %c0_i32, %c0_i32_0 : i32, i32
  }
  func.func @transform_7(%arg0: i32) -> (i32, i32) {
    %c0_i32 = arith.constant 0 : i32
    %c0_i32_0 = arith.constant 0 : i32
    %c0_i32_1 = arith.constant 0 : i32
    return %c0_i32, %c0_i32_0 : i32, i32
  }
  func.func @transform_8(%arg0: i32) -> (i32, i32) {
    %c0_i32 = arith.constant 0 : i32
    %c0_i32_0 = arith.constant 0 : i32
    %c0_i32_1 = arith.constant 0 : i32
    return %c0_i32, %c0_i32_0 : i32, i32
  }
  func.func @transform_9(%arg0: i32) -> (i32, i32) {
    %c0_i32 = arith.constant 0 : i32
    %c0_i32_0 = arith.constant 0 : i32
    %c0_i32_1 = arith.constant 0 : i32
    return %c0_i32, %c0_i32_0 : i32, i32
  }
  func.func @transform_10(%arg0: i32) -> (i32, i32) {
    %c0_i32 = arith.constant 0 : i32
    %c0_i32_0 = arith.constant 0 : i32
    %c0_i32_1 = arith.constant 0 : i32
    return %c0_i32, %c0_i32_0 : i32, i32
  }
  func.func @transform_11(%arg0: i32) -> (i32, i32) {
    %c0_i32 = arith.constant 0 : i32
    %c0_i32_0 = arith.constant 0 : i32
    %c0_i32_1 = arith.constant 0 : i32
    return %c0_i32, %c0_i32_0 : i32, i32
  }
  func.func @transform_12(%arg0: i32) -> (i32, i32) {
    %c0_i32 = arith.constant 0 : i32
    %c0_i32_0 = arith.constant 0 : i32
    %c0_i32_1 = arith.constant 0 : i32
    return %c0_i32, %c0_i32_0 : i32, i32
  }
  func.func @transform_13(%arg0: i32) -> (i32, i32) {
    %c0_i32 = arith.constant 0 : i32
    %c0_i32_0 = arith.constant 0 : i32
    %c0_i32_1 = arith.constant 0 : i32
    return %c0_i32, %c0_i32_0 : i32, i32
  }
  func.func @transform_14(%arg0: i32) -> (i32, i32) {
    %c0_i32 = arith.constant 0 : i32
    %c0_i32_0 = arith.constant 0 : i32
    %c0_i32_1 = arith.constant 0 : i32
    return %c0_i32, %c0_i32_0 : i32, i32
  }
  func.func @transform_15(%arg0: i32) -> (i32, i32) {
    %c0_i32 = arith.constant 0 : i32
    %c0_i32_0 = arith.constant 0 : i32
    %c0_i32_1 = arith.constant 0 : i32
    return %c0_i32, %c0_i32_0 : i32, i32
  }
  func.func @transform_16(%arg0: i32) -> (i32, i32) {
    %c0_i32 = arith.constant 0 : i32
    %c0_i32_0 = arith.constant 0 : i32
    %c0_i32_1 = arith.constant 0 : i32
    return %c0_i32, %c0_i32_0 : i32, i32
  }
  func.func @transform_17(%arg0: i32) -> (i32, i32) {
    %c0_i32 = arith.constant 0 : i32
    %c0_i32_0 = arith.constant 0 : i32
    %c0_i32_1 = arith.constant 0 : i32
    return %c0_i32, %c0_i32_0 : i32, i32
  }
  func.func @transform_18(%arg0: i32) -> (i32, i32) {
    %c0_i32 = arith.constant 0 : i32
    %c0_i32_0 = arith.constant 0 : i32
    %c0_i32_1 = arith.constant 0 : i32
    return %c0_i32, %c0_i32_0 : i32, i32
  }
  func.func @transform_19(%arg0: i32) -> (i32, i32) {
    %c0_i32 = arith.constant 0 : i32
    %c0_i32_0 = arith.constant 0 : i32
    return %arg0, %c0_i32 : i32, i32
  }
  func.func @transform_20(%arg0: i32) -> (i32, i32) {
    %c0_i32 = arith.constant 0 : i32
    %c0_i32_0 = arith.constant 0 : i32
    return %arg0, %c0_i32 : i32, i32
  }
  func.func @transform_21(%arg0: i32) -> (i32, i32) {
    %c0_i32 = arith.constant 0 : i32
    %c0_i32_0 = arith.constant 0 : i32
    return %arg0, %c0_i32 : i32, i32
  }
}

</mosaic_0001>

<llo_original>
// kernel: rec_ac_forward.1
$region0: #{rec_ac_forward.1}
  #allocation0 [shape = 'u32[]', space=smem, size = 0x4, offset = 0x4, fixed_abs, tag = 'smem constant byte address 0x4 - core index']
  #allocation1 [shape = 'u32[144,128]{1,0:T(1,128)}', space=vmem, size = 0x12000, scoped, tag = 'internal scratch']
  %s0 = inlined_call_operand.vmem [shape: f32[8,256], index: 0, kind: input, shape index: {}]
  %s1 = inlined_call_operand.vmem [shape: f32[8,384], index: 1, kind: input, shape index: {}]
  %s2 = inlined_call_operand.vmem [shape: f32[8,384], index: 2, kind: input, shape index: {}]
  %s3 = inlined_call_operand.vmem [shape: f32[8,1], index: 3, kind: input, shape index: {}]
  %s4 = inlined_call_operand.vmem [shape: bf16[256,1024], index: 4, kind: input, shape index: {}]
  %s5 = inlined_call_operand.vmem [shape: f32[1,256], index: 5, kind: input, shape index: {}]
  %s6 = inlined_call_operand.vmem [shape: bf16[256,128], index: 6, kind: input, shape index: {}]
  %s7 = inlined_call_operand.vmem [shape: f32[1,128], index: 7, kind: input, shape index: {}]
  %s8 = inlined_call_operand.vmem [shape: bf16[128,128], index: 8, kind: input, shape index: {}]
  %s9 = inlined_call_operand.vmem [shape: f32[1,128], index: 9, kind: input, shape index: {}]
  %s10 = inlined_call_operand.vmem [shape: bf16[128,384], index: 10, kind: input, shape index: {}]
  %s11 = inlined_call_operand.vmem [shape: bf16[384,384], index: 11, kind: input, shape index: {}]
  %s12 = inlined_call_operand.vmem [shape: f32[1,384], index: 12, kind: input, shape index: {}]
  %s13 = inlined_call_operand.vmem [shape: bf16[384,256], index: 13, kind: input, shape index: {}]
  %s14 = inlined_call_operand.vmem [shape: bf16[128,256], index: 14, kind: input, shape index: {}]
  %s15 = inlined_call_operand.vmem [shape: f32[1,256], index: 15, kind: input, shape index: {}]
  %s16 = inlined_call_operand.vmem [shape: f32[1,256], index: 16, kind: input, shape index: {}]
  %s17 = inlined_call_operand.vmem [shape: bf16[256,256], index: 17, kind: input, shape index: {}]
  %s18 = inlined_call_operand.vmem [shape: f32[1,256], index: 18, kind: input, shape index: {}]
  %s19 = inlined_call_operand.vmem [shape: f32[8,128], index: 19, kind: output, shape index: {0}]
  %s20 = inlined_call_operand.vmem [shape: f32[8,128], index: 20, kind: output, shape index: {1}]
  %s21 = inlined_call_operand.vmem [shape: f32[8,384], index: 21, kind: output, shape index: {2}]
  %22 = xla_tuple %s19, %s20, %s21
  %s23 = sld [smem:[#allocation0]]
  $region102: #{rec_ac_forward.1} parent=0
    _
  %s25 = ssub.s32 1, %s23
  %s26 = scalar_select 0, %s25, %s23
  // Predicated region
  $region2: #{rec_ac_forward.1} parent=0 // pred_check
    _
  $region3: #{rec_ac_forward.1} parent=0 // pred_check_branch
    %28 = sbr.rel (0) target = $region5
  $region4: #{rec_ac_forward.1} parent=0 // pred_region
    _
  $region5: #{rec_ac_forward.1} parent=0 // pred_fallthru
    _
  // Predicated region
  $region6: #{rec_ac_forward.1} parent=0 // pred_check
    _
  $region7: #{rec_ac_forward.1} parent=0 // pred_check_branch
    %30 = sbr.rel (0) target = $region9
  $region8: #{rec_ac_forward.1} parent=0 // pred_region
    _
  $region9: #{rec_ac_forward.1} parent=0 // pred_fallthru
    _
  // Predicated region
  $region10: #{rec_ac_forward.1} parent=0 // pred_check
    _
  $region11: #{rec_ac_forward.1} parent=0 // pred_check_branch
    %32 = sbr.rel (0) target = $region13
  $region12: #{rec_ac_forward.1} parent=0 // pred_region
    _
  $region13: #{rec_ac_forward.1} parent=0 // pred_fallthru
    _
  // Predicated region
  $region14: #{rec_ac_forward.1} parent=0 // pred_check
    _
  $region15: #{rec_ac_forward.1} parent=0 // pred_check_branch
    %34 = sbr.rel (0) target = $region17
  $region16: #{rec_ac_forward.1} parent=0 // pred_region
    _
  $region17: #{rec_ac_forward.1} parent=0 // pred_fallthru
    _
  // Predicated region
  $region18: #{rec_ac_forward.1} parent=0 // pred_check
    _
  $region19: #{rec_ac_forward.1} parent=0 // pred_check_branch
    %36 = sbr.rel (0) target = $region21
  $region20: #{rec_ac_forward.1} parent=0 // pred_region
    _
  $region21: #{rec_ac_forward.1} parent=0 // pred_fallthru
    _
  // Predicated region
  $region22: #{rec_ac_forward.1} parent=0 // pred_check
    _
  $region23: #{rec_ac_forward.1} parent=0 // pred_check_branch
    %38 = sbr.rel (0) target = $region25
  $region24: #{rec_ac_forward.1} parent=0 // pred_region
    _
  $region25: #{rec_ac_forward.1} parent=0 // pred_fallthru
    _
  // Predicated region
  $region26: #{rec_ac_forward.1} parent=0 // pred_check
    _
  $region27: #{rec_ac_forward.1} parent=0 // pred_check_branch
    %40 = sbr.rel (0) target = $region29
  $region28: #{rec_ac_forward.1} parent=0 // pred_region
    _
  $region29: #{rec_ac_forward.1} parent=0 // pred_fallthru
    _
  // Predicated region
  $region30: #{rec_ac_forward.1} parent=0 // pred_check
    _
  $region31: #{rec_ac_forward.1} parent=0 // pred_check_branch
    %42 = sbr.rel (0) target = $region33
  $region32: #{rec_ac_forward.1} parent=0 // pred_region
    _
  $region33: #{rec_ac_forward.1} parent=0 // pred_fallthru
    _
  // Predicated region
  $region34: #{rec_ac_forward.1} parent=0 // pred_check
    _
  $region35: #{rec_ac_forward.1} parent=0 // pred_check_branch
    %44 = sbr.rel (0) target = $region37
  $region36: #{rec_ac_forward.1} parent=0 // pred_region
    _
  $region37: #{rec_ac_forward.1} parent=0 // pred_fallthru
    _
  // Predicated region
  $region38: #{rec_ac_forward.1} parent=0 // pred_check
    _
  $region39: #{rec_ac_forward.1} parent=0 // pred_check_branch
    %46 = sbr.rel (0) target = $region41
  $region40: #{rec_ac_forward.1} parent=0 // pred_region
    _
  $region41: #{rec_ac_forward.1} parent=0 // pred_fallthru
    _
  // Predicated region
  $region42: #{rec_ac_forward.1} parent=0 // pred_check
    _
  $region43: #{rec_ac_forward.1} parent=0 // pred_check_branch
    %48 = sbr.rel (0) target = $region45
  $region44: #{rec_ac_forward.1} parent=0 // pred_region
    _
  $region45: #{rec_ac_forward.1} parent=0 // pred_fallthru
    _
  // Predicated region
  $region46: #{rec_ac_forward.1} parent=0 // pred_check
    _
  $region47: #{rec_ac_forward.1} parent=0 // pred_check_branch
    %50 = sbr.rel (0) target = $region49
  $region48: #{rec_ac_forward.1} parent=0 // pred_region
    _
  $region49: #{rec_ac_forward.1} parent=0 // pred_fallthru
    _
  // Predicated region
  $region50: #{rec_ac_forward.1} parent=0 // pred_check
    _
  $region51: #{rec_ac_forward.1} parent=0 // pred_check_branch
    %52 = sbr.rel (0) target = $region53
  $region52: #{rec_ac_forward.1} parent=0 // pred_region
    _
  $region53: #{rec_ac_forward.1} parent=0 // pred_fallthru
    _
  // Predicated region
  $region54: #{rec_ac_forward.1} parent=0 // pred_check
    _
  $region55: #{rec_ac_forward.1} parent=0 // pred_check_branch
    %54 = sbr.rel (0) target = $region57
  $region56: #{rec_ac_forward.1} parent=0 // pred_region
    _
  $region57: #{rec_ac_forward.1} parent=0 // pred_fallthru
    _
  // Predicated region
  $region58: #{rec_ac_forward.1} parent=0 // pred_check
    _
  $region59: #{rec_ac_forward.1} parent=0 // pred_check_branch
    %56 = sbr.rel (0) target = $region61
  $region60: #{rec_ac_forward.1} parent=0 // pred_region
    _
  $region61: #{rec_ac_forward.1} parent=0 // pred_fallthru
    _
  // Predicated region
  $region62: #{rec_ac_forward.1} parent=0 // pred_check
    _
  $region63: #{rec_ac_forward.1} parent=0 // pred_check_branch
    %58 = sbr.rel (0) target = $region65
  $region64: #{rec_ac_forward.1} parent=0 // pred_region
    _
  $region65: #{rec_ac_forward.1} parent=0 // pred_fallthru
    _
  // Predicated region
  $region66: #{rec_ac_forward.1} parent=0 // pred_check
    _
  $region67: #{rec_ac_forward.1} parent=0 // pred_check_branch
    %60 = sbr.rel (0) target = $region69
  $region68: #{rec_ac_forward.1} parent=0 // pred_region
    _
  $region69: #{rec_ac_forward.1} parent=0 // pred_fallthru
    _
  // Predicated region
  $region70: #{rec_ac_forward.1} parent=0 // pred_check
    _
  $region71: #{rec_ac_forward.1} parent=0 // pred_check_branch
    %62 = sbr.rel (0) target = $region73
  $region72: #{rec_ac_forward.1} parent=0 // pred_region
    _
  $region73: #{rec_ac_forward.1} parent=0 // pred_fallthru
    _
  // Predicated region
  $region74: #{rec_ac_forward.1} parent=0 // pred_check
    _
  $region75: #{rec_ac_forward.1} parent=0 // pred_check_branch
    %64 = sbr.rel (0) target = $region77
  $region76: #{rec_ac_forward.1} parent=0 // pred_region
    _
  $region77: #{rec_ac_forward.1} parent=0 // pred_fallthru
    _
  %v66 = vld [vmem:[%s0] sm:$0xff]
  %v67 = vld [vmem:[%s0 + $0x8] sm:$0xff]
  %v68 = vmul.f32 %v66, 0.003921569
  %v69 = vmul.f32 %v67, 0.003921569
  %v70 = vpack.c.bf16 %v68, %v68
  %v71 = vpack.c.bf16 %v69, %v69
  %v72 = vld [vmem:[%s4] sm:$0xff]
  %v73 = vld [vmem:[%s4 + $0x8] sm:$0xff]
  %v74 = vld [vmem:[%s4 + $0x10] sm:$0xff]
  %v75 = vld [vmem:[%s4 + $0x18] sm:$0xff]
  %v76 = vld [vmem:[%s4 + $0x20] sm:$0xff]
  %v77 = vld [vmem:[%s4 + $0x28] sm:$0xff]
  %v78 = vld [vmem:[%s4 + $0x30] sm:$0xff]
  %v79 = vld [vmem:[%s4 + $0x38] sm:$0xff]
  %v80 = vld [vmem:[%s4 + $0x40] sm:$0xff]
  %v81 = vld [vmem:[%s4 + $0x48] sm:$0xff]
  %v82 = vld [vmem:[%s4 + $0x50] sm:$0xff]
  %v83 = vld [vmem:[%s4 + $0x58] sm:$0xff]
  %v84 = vld [vmem:[%s4 + $0x60] sm:$0xff]
  %v85 = vld [vmem:[%s4 + $0x68] sm:$0xff]
  %v86 = vld [vmem:[%s4 + $0x70] sm:$0xff]
  %v87 = vld [vmem:[%s4 + $0x78] sm:$0xff]
  %v88 = vld [vmem:[%s4 + $0x80] sm:$0xff]
  %v89 = vld [vmem:[%s4 + $0x88] sm:$0xff]
  %v90 = vld [vmem:[%s4 + $0x90] sm:$0xff]
  %v91 = vld [vmem:[%s4 + $0x98] sm:$0xff]
  %v92 = vld [vmem:[%s4 + $0xa0] sm:$0xff]
  %v93 = vld [vmem:[%s4 + $0xa8] sm:$0xff]
  %v94 = vld [vmem:[%s4 + $0xb0] sm:$0xff]
  %v95 = vld [vmem:[%s4 + $0xb8] sm:$0xff]
  %v96 = vld [vmem:[%s4 + $0xc0] sm:$0xff]
  %v97 = vld [vmem:[%s4 + $0xc8] sm:$0xff]
  %v98 = vld [vmem:[%s4 + $0xd0] sm:$0xff]
  %v99 = vld [vmem:[%s4 + $0xd8] sm:$0xff]
  %v100 = vld [vmem:[%s4 + $0xe0] sm:$0xff]
  %v101 = vld [vmem:[%s4 + $0xe8] sm:$0xff]
  %v102 = vld [vmem:[%s4 + $0xf0] sm:$0xff]
  %v103 = vld [vmem:[%s4 + $0xf8] sm:$0xff]
  %v104 = vld [vmem:[%s4 + $0x100] sm:$0xff]
  %v105 = vld [vmem:[%s4 + $0x108] sm:$0xff]
  %v106 = vld [vmem:[%s4 + $0x110] sm:$0xff]
  %v107 = vld [vmem:[%s4 + $0x118] sm:$0xff]
  %v108 = vld [vmem:[%s4 + $0x120] sm:$0xff]
  %v109 = vld [vmem:[%s4 + $0x128] sm:$0xff]
  %v110 = vld [vmem:[%s4 + $0x130] sm:$0xff]
  %v111 = vld [vmem:[%s4 + $0x138] sm:$0xff]
  %v112 = vld [vmem:[%s4 + $0x140] sm:$0xff]
  %v113 = vld [vmem:[%s4 + $0x148] sm:$0xff]
  %v114 = vld [vmem:[%s4 + $0x150] sm:$0xff]
  %v115 = vld [vmem:[%s4 + $0x158] sm:$0xff]
  %v116 = vld [vmem:[%s4 + $0x160] sm:$0xff]
  %v117 = vld [vmem:[%s4 + $0x168] sm:$0xff]
  %v118 = vld [vmem:[%s4 + $0x170] sm:$0xff]
  %v119 = vld [vmem:[%s4 + $0x178] sm:$0xff]
  %v120 = vld [vmem:[%s4 + $0x180] sm:$0xff]
  %v121 = vld [vmem:[%s4 + $0x188] sm:$0xff]
  %v122 = vld [vmem:[%s4 + $0x190] sm:$0xff]
  %v123 = vld [vmem:[%s4 + $0x198] sm:$0xff]
  %v124 = vld [vmem:[%s4 + $0x1a0] sm:$0xff]
  %v125 = vld [vmem:[%s4 + $0x1a8] sm:$0xff]
  %v126 = vld [vmem:[%s4 + $0x1b0] sm:$0xff]
  %v127 = vld [vmem:[%s4 + $0x1b8] sm:$0xff]
  %v128 = vld [vmem:[%s4 + $0x1c0] sm:$0xff]
  %v129 = vld [vmem:[%s4 + $0x1c8] sm:$0xff]
  %v130 = vld [vmem:[%s4 + $0x1d0] sm:$0xff]
  %v131 = vld [vmem:[%s4 + $0x1d8] sm:$0xff]
  %v132 = vld [vmem:[%s4 + $0x1e0] sm:$0xff]
  %v133 = vld [vmem:[%s4 + $0x1e8] sm:$0xff]
  %v134 = vld [vmem:[%s4 + $0x1f0] sm:$0xff]
  %v135 = vld [vmem:[%s4 + $0x1f8] sm:$0xff]
  %v136 = vld [vmem:[%s4 + $0x200] sm:$0xff]
  %v137 = vld [vmem:[%s4 + $0x208] sm:$0xff]
  %v138 = vld [vmem:[%s4 + $0x210] sm:$0xff]
  %v139 = vld [vmem:[%s4 + $0x218] sm:$0xff]
  %v140 = vld [vmem:[%s4 + $0x220] sm:$0xff]
  %v141 = vld [vmem:[%s4 + $0x228] sm:$0xff]
  %v142 = vld [vmem:[%s4 + $0x230] sm:$0xff]
  %v143 = vld [vmem:[%s4 + $0x238] sm:$0xff]
  %v144 = vld [vmem:[%s4 + $0x240] sm:$0xff]
  %v145 = vld [vmem:[%s4 + $0x248] sm:$0xff]
  %v146 = vld [vmem:[%s4 + $0x250] sm:$0xff]
  %v147 = vld [vmem:[%s4 + $0x258] sm:$0xff]
  %v148 = vld [vmem:[%s4 + $0x260] sm:$0xff]
  %v149 = vld [vmem:[%s4 + $0x268] sm:$0xff]
  %v150 = vld [vmem:[%s4 + $0x270] sm:$0xff]
  %v151 = vld [vmem:[%s4 + $0x278] sm:$0xff]
  %v152 = vld [vmem:[%s4 + $0x280] sm:$0xff]
  %v153 = vld [vmem:[%s4 + $0x288] sm:$0xff]
  %v154 = vld [vmem:[%s4 + $0x290] sm:$0xff]
  %v155 = vld [vmem:[%s4 + $0x298] sm:$0xff]
  %v156 = vld [vmem:[%s4 + $0x2a0] sm:$0xff]
  %v157 = vld [vmem:[%s4 + $0x2a8] sm:$0xff]
  %v158 = vld [vmem:[%s4 + $0x2b0] sm:$0xff]
  %v159 = vld [vmem:[%s4 + $0x2b8] sm:$0xff]
  %v160 = vld [vmem:[%s4 + $0x2c0] sm:$0xff]
  %v161 = vld [vmem:[%s4 + $0x2c8] sm:$0xff]
  %v162 = vld [vmem:[%s4 + $0x2d0] sm:$0xff]
  %v163 = vld [vmem:[%s4 + $0x2d8] sm:$0xff]
  %v164 = vld [vmem:[%s4 + $0x2e0] sm:$0xff]
  %v165 = vld [vmem:[%s4 + $0x2e8] sm:$0xff]
  %v166 = vld [vmem:[%s4 + $0x2f0] sm:$0xff]
  %v167 = vld [vmem:[%s4 + $0x2f8] sm:$0xff]
  %v168 = vld [vmem:[%s4 + $0x300] sm:$0xff]
  %v169 = vld [vmem:[%s4 + $0x308] sm:$0xff]
  %v170 = vld [vmem:[%s4 + $0x310] sm:$0xff]
  %v171 = vld [vmem:[%s4 + $0x318] sm:$0xff]
  %v172 = vld [vmem:[%s4 + $0x320] sm:$0xff]
  %v173 = vld [vmem:[%s4 + $0x328] sm:$0xff]
  %v174 = vld [vmem:[%s4 + $0x330] sm:$0xff]
  %v175 = vld [vmem:[%s4 + $0x338] sm:$0xff]
  %v176 = vld [vmem:[%s4 + $0x340] sm:$0xff]
  %v177 = vld [vmem:[%s4 + $0x348] sm:$0xff]
  %v178 = vld [vmem:[%s4 + $0x350] sm:$0xff]
  %v179 = vld [vmem:[%s4 + $0x358] sm:$0xff]
  %v180 = vld [vmem:[%s4 + $0x360] sm:$0xff]
  %v181 = vld [vmem:[%s4 + $0x368] sm:$0xff]
  %v182 = vld [vmem:[%s4 + $0x370] sm:$0xff]
  %v183 = vld [vmem:[%s4 + $0x378] sm:$0xff]
  %v184 = vld [vmem:[%s4 + $0x380] sm:$0xff]
  %v185 = vld [vmem:[%s4 + $0x388] sm:$0xff]
  %v186 = vld [vmem:[%s4 + $0x390] sm:$0xff]
  %v187 = vld [vmem:[%s4 + $0x398] sm:$0xff]
  %v188 = vld [vmem:[%s4 + $0x3a0] sm:$0xff]
  %v189 = vld [vmem:[%s4 + $0x3a8] sm:$0xff]
  %v190 = vld [vmem:[%s4 + $0x3b0] sm:$0xff]
  %v191 = vld [vmem:[%s4 + $0x3b8] sm:$0xff]
  %v192 = vld [vmem:[%s4 + $0x3c0] sm:$0xff]
  %v193 = vld [vmem:[%s4 + $0x3c8] sm:$0xff]
  %v194 = vld [vmem:[%s4 + $0x3d0] sm:$0xff]
  %v195 = vld [vmem:[%s4 + $0x3d8] sm:$0xff]
  %v196 = vld [vmem:[%s4 + $0x3e0] sm:$0xff]
  %v197 = vld [vmem:[%s4 + $0x3e8] sm:$0xff]
  %v198 = vld [vmem:[%s4 + $0x3f0] sm:$0xff]
  %v199 = vld [vmem:[%s4 + $0x3f8] sm:$0xff]
  %v328 = vunpack.c.l.b16 %v72
  %v329 = vunpack.c.h.b16 %v72
  %v330 = vunpack.c.l.b16 %v73
  %v331 = vunpack.c.h.b16 %v73
  %v332 = vunpack.c.l.b16 %v74
  %v333 = vunpack.c.h.b16 %v74
  %v334 = vunpack.c.l.b16 %v75
  %v335 = vunpack.c.h.b16 %v75
  %v336 = vunpack.c.l.b16 %v76
  %v337 = vunpack.c.h.b16 %v76
  %v338 = vunpack.c.l.b16 %v77
  %v339 = vunpack.c.h.b16 %v77
  %v340 = vunpack.c.l.b16 %v78
  %v341 = vunpack.c.h.b16 %v78
  %v342 = vunpack.c.l.b16 %v79
  %v343 = vunpack.c.h.b16 %v79
  %v344 = vunpack.c.l.b16 %v80
  %v345 = vunpack.c.h.b16 %v80
  %v346 = vunpack.c.l.b16 %v81
  %v347 = vunpack.c.h.b16 %v81
  %v348 = vunpack.c.l.b16 %v82
  %v349 = vunpack.c.h.b16 %v82
  %v350 = vunpack.c.l.b16 %v83
  %v351 = vunpack.c.h.b16 %v83
  %v352 = vunpack.c.l.b16 %v84
  %v353 = vunpack.c.h.b16 %v84
  %v354 = vunpack.c.l.b16 %v85
  %v355 = vunpack.c.h.b16 %v85
  %v356 = vunpack.c.l.b16 %v86
  %v357 = vunpack.c.h.b16 %v86
  %v358 = vunpack.c.l.b16 %v87
  %v359 = vunpack.c.h.b16 %v87
  %v360 = vunpack.c.l.b16 %v88
  %v361 = vunpack.c.h.b16 %v88
  %v362 = vunpack.c.l.b16 %v89
  %v363 = vunpack.c.h.b16 %v89
  %v364 = vunpack.c.l.b16 %v90
  %v365 = vunpack.c.h.b16 %v90
  %v366 = vunpack.c.l.b16 %v91
  %v367 = vunpack.c.h.b16 %v91
  %v368 = vunpack.c.l.b16 %v92
  %v369 = vunpack.c.h.b16 %v92
  %v370 = vunpack.c.l.b16 %v93
  %v371 = vunpack.c.h.b16 %v93
  %v372 = vunpack.c.l.b16 %v94
  %v373 = vunpack.c.h.b16 %v94
  %v374 = vunpack.c.l.b16 %v95
  %v375 = vunpack.c.h.b16 %v95
  %v376 = vunpack.c.l.b16 %v96
  %v377 = vunpack.c.h.b16 %v96
  %v378 = vunpack.c.l.b16 %v97
  %v379 = vunpack.c.h.b16 %v97
  %v380 = vunpack.c.l.b16 %v98
  %v381 = vunpack.c.h.b16 %v98
  %v382 = vunpack.c.l.b16 %v99
  %v383 = vunpack.c.h.b16 %v99
  %v384 = vunpack.c.l.b16 %v100
  %v385 = vunpack.c.h.b16 %v100
  %v386 = vunpack.c.l.b16 %v101
  %v387 = vunpack.c.h.b16 %v101
  %v388 = vunpack.c.l.b16 %v102
  %v389 = vunpack.c.h.b16 %v102
  %v390 = vunpack.c.l.b16 %v103
  %v391 = vunpack.c.h.b16 %v103
  %v392 = vunpack.c.l.b16 %v104
  %v393 = vunpack.c.h.b16 %v104
  %v394 = vunpack.c.l.b16 %v105
  %v395 = vunpack.c.h.b16 %v105
  %v396 = vunpack.c.l.b16 %v106
  %v397 = vunpack.c.h.b16 %v106
  %v398 = vunpack.c.l.b16 %v107
  %v399 = vunpack.c.h.b16 %v107
  %v400 = vunpack.c.l.b16 %v108
  %v401 = vunpack.c.h.b16 %v108
  %v402 = vunpack.c.l.b16 %v109
  %v403 = vunpack.c.h.b16 %v109
  %v404 = vunpack.c.l.b16 %v110
  %v405 = vunpack.c.h.b16 %v110
  %v406 = vunpack.c.l.b16 %v111
  %v407 = vunpack.c.h.b16 %v111
  %v408 = vunpack.c.l.b16 %v112
  %v409 = vunpack.c.h.b16 %v112
  %v410 = vunpack.c.l.b16 %v113
  %v411 = vunpack.c.h.b16 %v113
  %v412 = vunpack.c.l.b16 %v114
  %v413 = vunpack.c.h.b16 %v114
  %v414 = vunpack.c.l.b16 %v115
  %v415 = vunpack.c.h.b16 %v115
  %v416 = vunpack.c.l.b16 %v116
  %v417 = vunpack.c.h.b16 %v116
  %v418 = vunpack.c.l.b16 %v117
  %v419 = vunpack.c.h.b16 %v117
  %v420 = vunpack.c.l.b16 %v118
  %v421 = vunpack.c.h.b16 %v118
  %v422 = vunpack.c.l.b16 %v119
  %v423 = vunpack.c.h.b16 %v119
  %v424 = vunpack.c.l.b16 %v120
  %v425 = vunpack.c.h.b16 %v120
  %v426 = vunpack.c.l.b16 %v121
  %v427 = vunpack.c.h.b16 %v121
  %v428 = vunpack.c.l.b16 %v122
  %v429 = vunpack.c.h.b16 %v122
  %v430 = vunpack.c.l.b16 %v123
  %v431 = vunpack.c.h.b16 %v123
  %v432 = vunpack.c.l.b16 %v124
  %v433 = vunpack.c.h.b16 %v124
  %v434 = vunpack.c.l.b16 %v125
  %v435 = vunpack.c.h.b16 %v125
  %v436 = vunpack.c.l.b16 %v126
  %v437 = vunpack.c.h.b16 %v126
  %v438 = vunpack.c.l.b16 %v127
  %v439 = vunpack.c.h.b16 %v127
  %v440 = vunpack.c.l.b16 %v128
  %v441 = vunpack.c.h.b16 %v128
  %v442 = vunpack.c.l.b16 %v129
  %v443 = vunpack.c.h.b16 %v129
  %v444 = vunpack.c.l.b16 %v130
  %v445 = vunpack.c.h.b16 %v130
  %v446 = vunpack.c.l.b16 %v131
  %v447 = vunpack.c.h.b16 %v131
  %v448 = vunpack.c.l.b16 %v132
  %v449 = vunpack.c.h.b16 %v132
  %v450 = vunpack.c.l.b16 %v133
  %v451 = vunpack.c.h.b16 %v133
  %v452 = vunpack.c.l.b16 %v134
  %v453 = vunpack.c.h.b16 %v134
  %v454 = vunpack.c.l.b16 %v135
  %v455 = vunpack.c.h.b16 %v135
  %v456 = vunpack.c.l.b16 %v136
  %v457 = vunpack.c.h.b16 %v136
  %v458 = vunpack.c.l.b16 %v137
  %v459 = vunpack.c.h.b16 %v137
  %v460 = vunpack.c.l.b16 %v138
  %v461 = vunpack.c.h.b16 %v138
  %v462 = vunpack.c.l.b16 %v139
  %v463 = vunpack.c.h.b16 %v139
  %v464 = vunpack.c.l.b16 %v140
  %v465 = vunpack.c.h.b16 %v140
  %v466 = vunpack.c.l.b16 %v141
  %v467 = vunpack.c.h.b16 %v141
  %v468 = vunpack.c.l.b16 %v142
  %v469 = vunpack.c.h.b16 %v142
  %v470 = vunpack.c.l.b16 %v143
  %v471 = vunpack.c.h.b16 %v143
  %v472 = vunpack.c.l.b16 %v144
  %v473 = vunpack.c.h.b16 %v144
  %v474 = vunpack.c.l.b16 %v145
  %v475 = vunpack.c.h.b16 %v145
  %v476 = vunpack.c.l.b16 %v146
  %v477 = vunpack.c.h.b16 %v146
  %v478 = vunpack.c.l.b16 %v147
  %v479 = vunpack.c.h.b16 %v147
  %v480 = vunpack.c.l.b16 %v148
  %v481 = vunpack.c.h.b16 %v148
  %v482 = vunpack.c.l.b16 %v149
  %v483 = vunpack.c.h.b16 %v149
  %v484 = vunpack.c.l.b16 %v150
  %v485 = vunpack.c.h.b16 %v150
  %v486 = vunpack.c.l.b16 %v151
  %v487 = vunpack.c.h.b16 %v151
  %v488 = vunpack.c.l.b16 %v152
  %v489 = vunpack.c.h.b16 %v152
  %v490 = vunpack.c.l.b16 %v153
  %v491 = vunpack.c.h.b16 %v153
  %v492 = vunpack.c.l.b16 %v154
  %v493 = vunpack.c.h.b16 %v154
  %v494 = vunpack.c.l.b16 %v155
  %v495 = vunpack.c.h.b16 %v155
  %v496 = vunpack.c.l.b16 %v156
  %v497 = vunpack.c.h.b16 %v156
  %v498 = vunpack.c.l.b16 %v157
  %v499 = vunpack.c.h.b16 %v157
  %v500 = vunpack.c.l.b16 %v158
  %v501 = vunpack.c.h.b16 %v158
  %v502 = vunpack.c.l.b16 %v159
  %v503 = vunpack.c.h.b16 %v159
  %v504 = vunpack.c.l.b16 %v160
  %v505 = vunpack.c.h.b16 %v160
  %v506 = vunpack.c.l.b16 %v161
  %v507 = vunpack.c.h.b16 %v161
  %v508 = vunpack.c.l.b16 %v162
  %v509 = vunpack.c.h.b16 %v162
  %v510 = vunpack.c.l.b16 %v163
  %v511 = vunpack.c.h.b16 %v163
  %v512 = vunpack.c.l.b16 %v164
  %v513 = vunpack.c.h.b16 %v164
  %v514 = vunpack.c.l.b16 %v165
  %v515 = vunpack.c.h.b16 %v165
  %v516 = vunpack.c.l.b16 %v166
  %v517 = vunpack.c.h.b16 %v166
  %v518 = vunpack.c.l.b16 %v167
  %v519 = vunpack.c.h.b16 %v167
  %v520 = vunpack.c.l.b16 %v168
  %v521 = vunpack.c.h.b16 %v168
  %v522 = vunpack.c.l.b16 %v169
  %v523 = vunpack.c.h.b16 %v169
  %v524 = vunpack.c.l.b16 %v170
  %v525 = vunpack.c.h.b16 %v170
  %v526 = vunpack.c.l.b16 %v171
  %v527 = vunpack.c.h.b16 %v171
  %v528 = vunpack.c.l.b16 %v172
  %v529 = vunpack.c.h.b16 %v172
  %v530 = vunpack.c.l.b16 %v173
  %v531 = vunpack.c.h.b16 %v173
  %v532 = vunpack.c.l.b16 %v174
  %v533 = vunpack.c.h.b16 %v174
  %v534 = vunpack.c.l.b16 %v175
  %v535 = vunpack.c.h.b16 %v175
  %v536 = vunpack.c.l.b16 %v176
  %v537 = vunpack.c.h.b16 %v176
  %v538 = vunpack.c.l.b16 %v177
  %v539 = vunpack.c.h.b16 %v177
  %v540 = vunpack.c.l.b16 %v178
  %v541 = vunpack.c.h.b16 %v178
  %v542 = vunpack.c.l.b16 %v179
  %v543 = vunpack.c.h.b16 %v179
  %v544 = vunpack.c.l.b16 %v180
  %v545 = vunpack.c.h.b16 %v180
  %v546 = vunpack.c.l.b16 %v181
  %v547 = vunpack.c.h.b16 %v181
  %v548 = vunpack.c.l.b16 %v182
  %v549 = vunpack.c.h.b16 %v182
  %v550 = vunpack.c.l.b16 %v183
  %v551 = vunpack.c.h.b16 %v183
  %v552 = vunpack.c.l.b16 %v184
  %v553 = vunpack.c.h.b16 %v184
  %v554 = vunpack.c.l.b16 %v185
  %v555 = vunpack.c.h.b16 %v185
  %v556 = vunpack.c.l.b16 %v186
  %v557 = vunpack.c.h.b16 %v186
  %v558 = vunpack.c.l.b16 %v187
  %v559 = vunpack.c.h.b16 %v187
  %v560 = vunpack.c.l.b16 %v188
  %v561 = vunpack.c.h.b16 %v188
  %v562 = vunpack.c.l.b16 %v189
  %v563 = vunpack.c.h.b16 %v189
  %v564 = vunpack.c.l.b16 %v190
  %v565 = vunpack.c.h.b16 %v190
  %v566 = vunpack.c.l.b16 %v191
  %v567 = vunpack.c.h.b16 %v191
  %v568 = vunpack.c.l.b16 %v192
  %v569 = vunpack.c.h.b16 %v192
  %v570 = vunpack.c.l.b16 %v193
  %v571 = vunpack.c.h.b16 %v193
  %v572 = vunpack.c.l.b16 %v194
  %v573 = vunpack.c.h.b16 %v194
  %v574 = vunpack.c.l.b16 %v195
  %v575 = vunpack.c.h.b16 %v195
  %v576 = vunpack.c.l.b16 %v196
  %v577 = vunpack.c.h.b16 %v196
  %v578 = vunpack.c.l.b16 %v197
  %v579 = vunpack.c.h.b16 %v197
  %v580 = vunpack.c.l.b16 %v198
  %v581 = vunpack.c.h.b16 %v198
  %v582 = vunpack.c.l.b16 %v199
  %v583 = vunpack.c.h.b16 %v199
  %v584 = vpack.c.b16 %v336, %v328
  %v585 = vpack.c.b16 %v337, %v329
  %v586 = vpack.c.b16 %v338, %v330
  %v587 = vpack.c.b16 %v339, %v331
  %v588 = vpack.c.b16 %v340, %v332
  %v589 = vpack.c.b16 %v341, %v333
  %v590 = vpack.c.b16 %v342, %v334
  %v591 = vpack.c.b16 %v343, %v335
  %v592 = vpack.c.b16 %v352, %v344
  %v593 = vpack.c.b16 %v353, %v345
  %v594 = vpack.c.b16 %v354, %v346
  %v595 = vpack.c.b16 %v355, %v347
  %v596 = vpack.c.b16 %v356, %v348
  %v597 = vpack.c.b16 %v357, %v349
  %v598 = vpack.c.b16 %v358, %v350
  %v599 = vpack.c.b16 %v359, %v351
  %v600 = vpack.c.b16 %v368, %v360
  %v601 = vpack.c.b16 %v369, %v361
  %v602 = vpack.c.b16 %v370, %v362
  %v603 = vpack.c.b16 %v371, %v363
  %v604 = vpack.c.b16 %v372, %v364
  %v605 = vpack.c.b16 %v373, %v365
  %v606 = vpack.c.b16 %v374, %v366
  %v607 = vpack.c.b16 %v375, %v367
  %v608 = vpack.c.b16 %v384, %v376
  %v609 = vpack.c.b16 %v385, %v377
  %v610 = vpack.c.b16 %v386, %v378
  %v611 = vpack.c.b16 %v387, %v379
  %v612 = vpack.c.b16 %v388, %v380
  %v613 = vpack.c.b16 %v389, %v381
  %v614 = vpack.c.b16 %v390, %v382
  %v615 = vpack.c.b16 %v391, %v383
  %v616 = vpack.c.b16 %v400, %v392
  %v617 = vpack.c.b16 %v401, %v393
  %v618 = vpack.c.b16 %v402, %v394
  %v619 = vpack.c.b16 %v403, %v395
  %v620 = vpack.c.b16 %v404, %v396
  %v621 = vpack.c.b16 %v405, %v397
  %v622 = vpack.c.b16 %v406, %v398
  %v623 = vpack.c.b16 %v407, %v399
  %v624 = vpack.c.b16 %v416, %v408
  %v625 = vpack.c.b16 %v417, %v409
  %v626 = vpack.c.b16 %v418, %v410
  %v627 = vpack.c.b16 %v419, %v411
  %v628 = vpack.c.b16 %v420, %v412
  %v629 = vpack.c.b16 %v421, %v413
  %v630 = vpack.c.b16 %v422, %v414
  %v631 = vpack.c.b16 %v423, %v415
  %v632 = vpack.c.b16 %v432, %v424
  %v633 = vpack.c.b16 %v433, %v425
  %v634 = vpack.c.b16 %v434, %v426
  %v635 = vpack.c.b16 %v435, %v427
  %v636 = vpack.c.b16 %v436, %v428
  %v637 = vpack.c.b16 %v437, %v429
  %v638 = vpack.c.b16 %v438, %v430
  %v639 = vpack.c.b16 %v439, %v431
  %v640 = vpack.c.b16 %v448, %v440
  %v641 = vpack.c.b16 %v449, %v441
  %v642 = vpack.c.b16 %v450, %v442
  %v643 = vpack.c.b16 %v451, %v443
  %v644 = vpack.c.b16 %v452, %v444
  %v645 = vpack.c.b16 %v453, %v445
  %v646 = vpack.c.b16 %v454, %v446
  %v647 = vpack.c.b16 %v455, %v447
  %v648 = vpack.c.b16 %v464, %v456
  %v649 = vpack.c.b16 %v465, %v457
  %v650 = vpack.c.b16 %v466, %v458
  %v651 = vpack.c.b16 %v467, %v459
  %v652 = vpack.c.b16 %v468, %v460
  %v653 = vpack.c.b16 %v469, %v461
  %v654 = vpack.c.b16 %v470, %v462
  %v655 = vpack.c.b16 %v471, %v463
  %v656 = vpack.c.b16 %v480, %v472
  %v657 = vpack.c.b16 %v481, %v473
  %v658 = vpack.c.b16 %v482, %v474
  %v659 = vpack.c.b16 %v483, %v475
  %v660 = vpack.c.b16 %v484, %v476
  %v661 = vpack.c.b16 %v485, %v477
  %v662 = vpack.c.b16 %v486, %v478
  %v663 = vpack.c.b16 %v487, %v479
  %v664 = vpack.c.b16 %v496, %v488
  %v665 = vpack.c.b16 %v497, %v489
  %v666 = vpack.c.b16 %v498, %v490
  %v667 = vpack.c.b16 %v499, %v491
  %v668 = vpack.c.b16 %v500, %v492
  %v669 = vpack.c.b16 %v501, %v493
  %v670 = vpack.c.b16 %v502, %v494
  %v671 = vpack.c.b16 %v503, %v495
  %v672 = vpack.c.b16 %v512, %v504
  %v673 = vpack.c.b16 %v513, %v505
  %v674 = vpack.c.b16 %v514, %v506
  %v675 = vpack.c.b16 %v515, %v507
  %v676 = vpack.c.b16 %v516, %v508
  %v677 = vpack.c.b16 %v517, %v509
  %v678 = vpack.c.b16 %v518, %v510
  %v679 = vpack.c.b16 %v519, %v511
  %v680 = vpack.c.b16 %v528, %v520
  %v681 = vpack.c.b16 %v529, %v521
  %v682 = vpack.c.b16 %v530, %v522
  %v683 = vpack.c.b16 %v531, %v523
  %v684 = vpack.c.b16 %v532, %v524
  %v685 = vpack.c.b16 %v533, %v525
  %v686 = vpack.c.b16 %v534, %v526
  %v687 = vpack.c.b16 %v535, %v527
  %v688 = vpack.c.b16 %v544, %v536
  %v689 = vpack.c.b16 %v545, %v537
  %v690 = vpack.c.b16 %v546, %v538
  %v691 = vpack.c.b16 %v547, %v539
  %v692 = vpack.c.b16 %v548, %v540
  %v693 = vpack.c.b16 %v549, %v541
  %v694 = vpack.c.b16 %v550, %v542
  %v695 = vpack.c.b16 %v551, %v543
  %v696 = vpack.c.b16 %v560, %v552
  %v697 = vpack.c.b16 %v561, %v553
  %v698 = vpack.c.b16 %v562, %v554
  %v699 = vpack.c.b16 %v563, %v555
  %v700 = vpack.c.b16 %v564, %v556
  %v701 = vpack.c.b16 %v565, %v557
  %v702 = vpack.c.b16 %v566, %v558
  %v703 = vpack.c.b16 %v567, %v559
  %v704 = vpack.c.b16 %v576, %v568
  %v705 = vpack.c.b16 %v577, %v569
  %v706 = vpack.c.b16 %v578, %v570
  %v707 = vpack.c.b16 %v579, %v571
  %v708 = vpack.c.b16 %v580, %v572
  %v709 = vpack.c.b16 %v581, %v573
  %v710 = vpack.c.b16 %v582, %v574
  %v711 = vpack.c.b16 %v583, %v575
  %840 = vmatprep.subr.bf16.mxu0 %v585
  %841 = vmatpush1.bf16.msra.mxu0 %v584
  %842 = vmatprep.subr.bf16.mxu0 %v593
  %843 = vmatpush1.bf16.msra.mxu0 %v592
  %844 = vmatprep.subr.bf16.mxu0 %v601
  %845 = vmatpush1.bf16.msra.mxu0 %v600
  %846 = vmatprep.subr.bf16.mxu0 %v609
  %847 = vmatpush1.bf16.msra.mxu0 %v608
  %848 = vmatprep.subr.bf16.mxu0 %v617
  %849 = vmatpush1.bf16.msra.mxu0 %v616
  %850 = vmatprep.subr.bf16.mxu0 %v625
  %851 = vmatpush1.bf16.msra.mxu0 %v624
  %852 = vmatprep.subr.bf16.mxu0 %v633
  %853 = vmatpush1.bf16.msra.mxu0 %v632
  %854 = vmatprep.subr.bf16.mxu0 %v641
  %855 = vmatpush1.bf16.msra.mxu0 %v640
  %856 = vmatprep.subr.bf16.mxu0 %v649
  %857 = vmatpush1.bf16.msra.mxu0 %v648
  %858 = vmatprep.subr.bf16.mxu0 %v657
  %859 = vmatpush1.bf16.msra.mxu0 %v656
  %860 = vmatprep.subr.bf16.mxu0 %v665
  %861 = vmatpush1.bf16.msra.mxu0 %v664
  %862 = vmatprep.subr.bf16.mxu0 %v673
  %863 = vmatpush1.bf16.msra.mxu0 %v672
  %864 = vmatprep.subr.bf16.mxu0 %v681
  %865 = vmatpush1.bf16.msra.mxu0 %v680
  %866 = vmatprep.subr.bf16.mxu0 %v689
  %867 = vmatpush1.bf16.msra.mxu0 %v688
  %868 = vmatprep.subr.bf16.mxu0 %v697
  %869 = vmatpush1.bf16.msra.mxu0 %v696
  %870 = vmatprep.subr.bf16.mxu0 %v705
  %871 = vmatpush1.bf16.msra.mxu0 %v704
  %872 = vmatprep.mubr.bf16.mxu0 %v71
  %873 = vmatmul.mubr.bf16.gmra.mrb[0].mxu0 %v70
  %v874 = vpop.f32.mrb[0].mxu0
  %v875 = vadd.f32 0.0, %v874
  %v876 = vpop.f32.mrb[0].mxu0
  %v877 = vadd.f32 0.0, %v876
  %v878 = vpop.f32.mrb[0].mxu0
  %v879 = vpop.f32.mrb[0].mxu0
  %880 = vdwg.mxu0
  %881 = vmatprep.subr.bf16.mxu0 %v587
  %882 = vmatpush1.bf16.msra.mxu0 %v586
  %883 = vmatprep.subr.bf16.mxu0 %v595
  %884 = vmatpush1.bf16.msra.mxu0 %v594
  %885 = vmatprep.subr.bf16.mxu0 %v603
  %886 = vmatpush1.bf16.msra.mxu0 %v602
  %887 = vmatprep.subr.bf16.mxu0 %v611
  %888 = vmatpush1.bf16.msra.mxu0 %v610
  %889 = vmatprep.subr.bf16.mxu0 %v619
  %890 = vmatpush1.bf16.msra.mxu0 %v618
  %891 = vmatprep.subr.bf16.mxu0 %v627
  %892 = vmatpush1.bf16.msra.mxu0 %v626
  %893 = vmatprep.subr.bf16.mxu0 %v635
  %894 = vmatpush1.bf16.msra.mxu0 %v634
  %895 = vmatprep.subr.bf16.mxu0 %v643
  %896 = vmatpush1.bf16.msra.mxu0 %v642
  %897 = vmatprep.subr.bf16.mxu0 %v651
  %898 = vmatpush1.bf16.msra.mxu0 %v650
  %899 = vmatprep.subr.bf16.mxu0 %v659
  %900 = vmatpush1.bf16.msra.mxu0 %v658
  %901 = vmatprep.subr.bf16.mxu0 %v667
  %902 = vmatpush1.bf16.msra.mxu0 %v666
  %903 = vmatprep.subr.bf16.mxu0 %v675
  %904 = vmatpush1.bf16.msra.mxu0 %v674
  %905 = vmatprep.subr.bf16.mxu0 %v683
  %906 = vmatpush1.bf16.msra.mxu0 %v682
  %907 = vmatprep.subr.bf16.mxu0 %v691
  %908 = vmatpush1.bf16.msra.mxu0 %v690
  %909 = vmatprep.subr.bf16.mxu0 %v699
  %910 = vmatpush1.bf16.msra.mxu0 %v698
  %911 = vmatprep.subr.bf16.mxu0 %v707
  %912 = vmatpush1.bf16.msra.mxu0 %v706
  %913 = vmatprep.mubr.bf16.mxu0 %v71
  %914 = vmatmul.mubr.bf16.gmra.mrb[0].mxu0 %v70
  %v915 = vpop.f32.mrb[0].mxu0
  %v916 = vadd.f32 0.0, %v915
  %v917 = vpop.f32.mrb[0].mxu0
  %v918 = vadd.f32 0.0, %v917
  %v919 = vpop.f32.mrb[0].mxu0
  %v920 = vpop.f32.mrb[0].mxu0
  %921 = vdwg.mxu0
  %922 = vmatprep.subr.bf16.mxu0 %v589
  %923 = vmatpush1.bf16.msra.mxu0 %v588
  %924 = vmatprep.subr.bf16.mxu0 %v597
  %925 = vmatpush1.bf16.msra.mxu0 %v596
  %926 = vmatprep.subr.bf16.mxu0 %v605
  %927 = vmatpush1.bf16.msra.mxu0 %v604
  %928 = vmatprep.subr.bf16.mxu0 %v613
  %929 = vmatpush1.bf16.msra.mxu0 %v612
  %930 = vmatprep.subr.bf16.mxu0 %v621
  %931 = vmatpush1.bf16.msra.mxu0 %v620
  %932 = vmatprep.subr.bf16.mxu0 %v629
  %933 = vmatpush1.bf16.msra.mxu0 %v628
  %934 = vmatprep.subr.bf16.mxu0 %v637
  %935 = vmatpush1.bf16.msra.mxu0 %v636
  %936 = vmatprep.subr.bf16.mxu0 %v645
  %937 = vmatpush1.bf16.msra.mxu0 %v644
  %938 = vmatprep.subr.bf16.mxu0 %v653
  %939 = vmatpush1.bf16.msra.mxu0 %v652
  %940 = vmatprep.subr.bf16.mxu0 %v661
  %941 = vmatpush1.bf16.msra.mxu0 %v660
  %942 = vmatprep.subr.bf16.mxu0 %v669
  %943 = vmatpush1.bf16.msra.mxu0 %v668
  %944 = vmatprep.subr.bf16.mxu0 %v677
  %945 = vmatpush1.bf16.msra.mxu0 %v676
  %946 = vmatprep.subr.bf16.mxu0 %v685
  %947 = vmatpush1.bf16.msra.mxu0 %v684
  %948 = vmatprep.subr.bf16.mxu0 %v693
  %949 = vmatpush1.bf16.msra.mxu0 %v692
  %950 = vmatprep.subr.bf16.mxu0 %v701
  %951 = vmatpush1.bf16.msra.mxu0 %v700
  %952 = vmatprep.subr.bf16.mxu0 %v709
  %953 = vmatpush1.bf16.msra.mxu0 %v708
  %954 = vmatprep.mubr.bf16.mxu0 %v71
  %955 = vmatmul.mubr.bf16.gmra.mrb[0].mxu0 %v70
  %v956 = vpop.f32.mrb[0].mxu0
  %v957 = vadd.f32 0.0, %v956
  %v958 = vpop.f32.mrb[0].mxu0
  %v959 = vadd.f32 0.0, %v958
  %v960 = vpop.f32.mrb[0].mxu0
  %v961 = vpop.f32.mrb[0].mxu0
  %962 = vdwg.mxu0
  %963 = vmatprep.subr.bf16.mxu0 %v591
  %964 = vmatpush1.bf16.msra.mxu0 %v590
  %965 = vmatprep.subr.bf16.mxu0 %v599
  %966 = vmatpush1.bf16.msra.mxu0 %v598
  %967 = vmatprep.subr.bf16.mxu0 %v607
  %968 = vmatpush1.bf16.msra.mxu0 %v606
  %969 = vmatprep.subr.bf16.mxu0 %v615
  %970 = vmatpush1.bf16.msra.mxu0 %v614
  %971 = vmatprep.subr.bf16.mxu0 %v623
  %972 = vmatpush1.bf16.msra.mxu0 %v622
  %973 = vmatprep.subr.bf16.mxu0 %v631
  %974 = vmatpush1.bf16.msra.mxu0 %v630
  %975 = vmatprep.subr.bf16.mxu0 %v639
  %976 = vmatpush1.bf16.msra.mxu0 %v638
  %977 = vmatprep.subr.bf16.mxu0 %v647
  %978 = vmatpush1.bf16.msra.mxu0 %v646
  %979 = vmatprep.subr.bf16.mxu0 %v655
  %980 = vmatpush1.bf16.msra.mxu0 %v654
  %981 = vmatprep.subr.bf16.mxu0 %v663
  %982 = vmatpush1.bf16.msra.mxu0 %v662
  %983 = vmatprep.subr.bf16.mxu0 %v671
  %984 = vmatpush1.bf16.msra.mxu0 %v670
  %985 = vmatprep.subr.bf16.mxu0 %v679
  %986 = vmatpush1.bf16.msra.mxu0 %v678
  %987 = vmatprep.subr.bf16.mxu0 %v687
  %988 = vmatpush1.bf16.msra.mxu0 %v686
  %989 = vmatprep.subr.bf16.mxu0 %v695
  %990 = vmatpush1.bf16.msra.mxu0 %v694
  %991 = vmatprep.subr.bf16.mxu0 %v703
  %992 = vmatpush1.bf16.msra.mxu0 %v702
  %993 = vmatprep.subr.bf16.mxu0 %v711
  %994 = vmatpush1.bf16.msra.mxu0 %v710
  %995 = vmatprep.mubr.bf16.mxu0 %v71
  %996 = vmatmul.mubr.bf16.gmra.mrb[0].mxu0 %v70
  %v997 = vpop.f32.mrb[0].mxu0
  %v998 = vadd.f32 0.0, %v997
  %v999 = vpop.f32.mrb[0].mxu0
  %v1000 = vadd.f32 0.0, %v999
  %v1001 = vpop.f32.mrb[0].mxu0
  %v1002 = vpop.f32.mrb[0].mxu0
  %1003 = vdwg.mxu0
  %v1004 = vmax.f32 %v875, %v916
  %v1005 = vmax.f32 %v877, %v918
  %v1006 = vmax.f32 %v957, %v998
  %v1007 = vmax.f32 %v959, %v1000
  %v1008 = vmax.f32 %v1004, %v1006
  %v1009 = vmax.f32 %v1005, %v1007
  %v1010 = vld [vmem:[%s5] sm:$0x3]
  %v1012 = vlaneseq
  %v1013 = vshrl.u32 %v1012, 7
  %v1014 = vsub.s32 0, %v1013
  %v1015 = vrot.slane %v1010, %v1014
  %v1016 = vlaneseq
  %v1017 = vshrl.u32 %v1016, 7
  %v1018 = vsub.s32 1, %v1017
  %v1019 = vrot.slane %v1010, %v1018
  %v1022 = vadd.f32 %v1008, %v1015
  %v1023 = vadd.f32 %v1009, %v1019
  %v1024 = vmax.f32 %v1022, 0.0
  %v1025 = vmax.f32 %v1023, 0.0
  %v1026 = vpack.c.bf16 %v1024, %v1024
  %v1027 = vpack.c.bf16 %v1025, %v1025
  %v1028 = vld [vmem:[%s6] sm:$0xf]
  %v1029 = vld [vmem:[%s6 + $0x4] sm:$0xf]
  %v1030 = vld [vmem:[%s6 + $0x8] sm:$0xf]
  %v1031 = vld [vmem:[%s6 + $0xc] sm:$0xf]
  %v1032 = vld [vmem:[%s6 + $0x10] sm:$0xf]
  %v1033 = vld [vmem:[%s6 + $0x14] sm:$0xf]
  %v1034 = vld [vmem:[%s6 + $0x18] sm:$0xf]
  %v1035 = vld [vmem:[%s6 + $0x1c] sm:$0xf]
  %v1036 = vld [vmem:[%s6 + $0x20] sm:$0xf]
  %v1037 = vld [vmem:[%s6 + $0x24] sm:$0xf]
  %v1038 = vld [vmem:[%s6 + $0x28] sm:$0xf]
  %v1039 = vld [vmem:[%s6 + $0x2c] sm:$0xf]
  %v1040 = vld [vmem:[%s6 + $0x30] sm:$0xf]
  %v1041 = vld [vmem:[%s6 + $0x34] sm:$0xf]
  %v1042 = vld [vmem:[%s6 + $0x38] sm:$0xf]
  %v1043 = vld [vmem:[%s6 + $0x3c] sm:$0xf]
  %v1044 = vld [vmem:[%s6 + $0x40] sm:$0xf]
  %v1045 = vld [vmem:[%s6 + $0x44] sm:$0xf]
  %v1046 = vld [vmem:[%s6 + $0x48] sm:$0xf]
  %v1047 = vld [vmem:[%s6 + $0x4c] sm:$0xf]
  %v1048 = vld [vmem:[%s6 + $0x50] sm:$0xf]
  %v1049 = vld [vmem:[%s6 + $0x54] sm:$0xf]
  %v1050 = vld [vmem:[%s6 + $0x58] sm:$0xf]
  %v1051 = vld [vmem:[%s6 + $0x5c] sm:$0xf]
  %v1052 = vld [vmem:[%s6 + $0x60] sm:$0xf]
  %v1053 = vld [vmem:[%s6 + $0x64] sm:$0xf]
  %v1054 = vld [vmem:[%s6 + $0x68] sm:$0xf]
  %v1055 = vld [vmem:[%s6 + $0x6c] sm:$0xf]
  %v1056 = vld [vmem:[%s6 + $0x70] sm:$0xf]
  %v1057 = vld [vmem:[%s6 + $0x74] sm:$0xf]
  %v1058 = vld [vmem:[%s6 + $0x78] sm:$0xf]
  %v1059 = vld [vmem:[%s6 + $0x7c] sm:$0xf]
  %v1060 = vld [vmem:[%s7] sm:$0x1]
  %v1062 = vlaneseq
  %v1063 = vshrl.u32 %v1062, 7
  %v1064 = vsub.s32 0, %v1063
  %v1065 = vrot.slane %v1060, %v1064
  %v1099 = vunpack.c.l.b16 %v1028
  %v1100 = vunpack.c.l.b16 %v1029
  %v1101 = vunpack.c.l.b16 %v1030
  %v1102 = vunpack.c.l.b16 %v1031
  %v1103 = vunpack.c.l.b16 %v1032
  %v1104 = vunpack.c.l.b16 %v1033
  %v1105 = vunpack.c.l.b16 %v1034
  %v1106 = vunpack.c.l.b16 %v1035
  %v1107 = vunpack.c.l.b16 %v1036
  %v1108 = vunpack.c.l.b16 %v1037
  %v1109 = vunpack.c.l.b16 %v1038
  %v1110 = vunpack.c.l.b16 %v1039
  %v1111 = vunpack.c.l.b16 %v1040
  %v1112 = vunpack.c.l.b16 %v1041
  %v1113 = vunpack.c.l.b16 %v1042
  %v1114 = vunpack.c.l.b16 %v1043
  %v1115 = vunpack.c.l.b16 %v1044
  %v1116 = vunpack.c.l.b16 %v1045
  %v1117 = vunpack.c.l.b16 %v1046
  %v1118 = vunpack.c.l.b16 %v1047
  %v1119 = vunpack.c.l.b16 %v1048
  %v1120 = vunpack.c.l.b16 %v1049
  %v1121 = vunpack.c.l.b16 %v1050
  %v1122 = vunpack.c.l.b16 %v1051
  %v1123 = vunpack.c.l.b16 %v1052
  %v1124 = vunpack.c.l.b16 %v1053
  %v1125 = vunpack.c.l.b16 %v1054
  %v1126 = vunpack.c.l.b16 %v1055
  %v1127 = vunpack.c.l.b16 %v1056
  %v1128 = vunpack.c.l.b16 %v1057
  %v1129 = vunpack.c.l.b16 %v1058
  %v1130 = vunpack.c.l.b16 %v1059
  %v1131 = vpack.c.b16 %v1100, %v1099
  %v1132 = vpack.c.b16 %v1102, %v1101
  %v1133 = vpack.c.b16 %v1104, %v1103
  %v1134 = vpack.c.b16 %v1106, %v1105
  %v1135 = vpack.c.b16 %v1108, %v1107
  %v1136 = vpack.c.b16 %v1110, %v1109
  %v1137 = vpack.c.b16 %v1112, %v1111
  %v1138 = vpack.c.b16 %v1114, %v1113
  %v1139 = vpack.c.b16 %v1116, %v1115
  %v1140 = vpack.c.b16 %v1118, %v1117
  %v1141 = vpack.c.b16 %v1120, %v1119
  %v1142 = vpack.c.b16 %v1122, %v1121
  %v1143 = vpack.c.b16 %v1124, %v1123
  %v1144 = vpack.c.b16 %v1126, %v1125
  %v1145 = vpack.c.b16 %v1128, %v1127
  %v1146 = vpack.c.b16 %v1130, %v1129
  %1163 = vmatprep.subr.bf16.mxu0 0
  %1164 = vmatpush1.bf16.msra.mxu0 %v1131
  %1165 = vmatprep.subr.bf16.mxu0 0
  %1166 = vmatpush1.bf16.msra.mxu0 %v1132
  %1167 = vmatprep.subr.bf16.mxu0 0
  %1168 = vmatpush1.bf16.msra.mxu0 %v1133
  %1169 = vmatprep.subr.bf16.mxu0 0
  %1170 = vmatpush1.bf16.msra.mxu0 %v1134
  %1171 = vmatprep.subr.bf16.mxu0 0
  %1172 = vmatpush1.bf16.msra.mxu0 %v1135
  %1173 = vmatprep.subr.bf16.mxu0 0
  %1174 = vmatpush1.bf16.msra.mxu0 %v1136
  %1175 = vmatprep.subr.bf16.mxu0 0
  %1176 = vmatpush1.bf16.msra.mxu0 %v1137
  %1177 = vmatprep.subr.bf16.mxu0 0
  %1178 = vmatpush1.bf16.msra.mxu0 %v1138
  %1179 = vmatprep.subr.bf16.mxu0 0
  %1180 = vmatpush1.bf16.msra.mxu0 %v1139
  %1181 = vmatprep.subr.bf16.mxu0 0
  %1182 = vmatpush1.bf16.msra.mxu0 %v1140
  %1183 = vmatprep.subr.bf16.mxu0 0
  %1184 = vmatpush1.bf16.msra.mxu0 %v1141
  %1185 = vmatprep.subr.bf16.mxu0 0
  %1186 = vmatpush1.bf16.msra.mxu0 %v1142
  %1187 = vmatprep.subr.bf16.mxu0 0
  %1188 = vmatpush1.bf16.msra.mxu0 %v1143
  %1189 = vmatprep.subr.bf16.mxu0 0
  %1190 = vmatpush1.bf16.msra.mxu0 %v1144
  %1191 = vmatprep.subr.bf16.mxu0 0
  %1192 = vmatpush1.bf16.msra.mxu0 %v1145
  %1193 = vmatprep.subr.bf16.mxu0 0
  %1194 = vmatpush1.bf16.msra.mxu0 %v1146
  %1195 = vmatprep.mubr.bf16.mxu0 %v1027
  %1196 = vmatmul.mubr.bf16.gmra.mrb[0].mxu0 %v1026
  %v1197 = vpop.f32.mrb[0].mxu0
  %v1198 = vadd.f32 %v1065, %v1197
  %v1199 = vpop.f32.mrb[0].mxu0
  %v1200 = vpop.f32.mrb[0].mxu0
  %v1201 = vpop.f32.mrb[0].mxu0
  %1202 = vdwg.mxu0
  %v1203 = vmax.f32 %v1198, 0.0
  %v1204 = vpack.c.bf16 %v1203, %v1203
  %v1205 = vld [vmem:[%s8] sm:$0xf]
  %v1206 = vld [vmem:[%s8 + $0x4] sm:$0xf]
  %v1207 = vld [vmem:[%s8 + $0x8] sm:$0xf]
  %v1208 = vld [vmem:[%s8 + $0xc] sm:$0xf]
  %v1209 = vld [vmem:[%s8 + $0x10] sm:$0xf]
  %v1210 = vld [vmem:[%s8 + $0x14] sm:$0xf]
  %v1211 = vld [vmem:[%s8 + $0x18] sm:$0xf]
  %v1212 = vld [vmem:[%s8 + $0x1c] sm:$0xf]
  %v1213 = vld [vmem:[%s8 + $0x20] sm:$0xf]
  %v1214 = vld [vmem:[%s8 + $0x24] sm:$0xf]
  %v1215 = vld [vmem:[%s8 + $0x28] sm:$0xf]
  %v1216 = vld [vmem:[%s8 + $0x2c] sm:$0xf]
  %v1217 = vld [vmem:[%s8 + $0x30] sm:$0xf]
  %v1218 = vld [vmem:[%s8 + $0x34] sm:$0xf]
  %v1219 = vld [vmem:[%s8 + $0x38] sm:$0xf]
  %v1220 = vld [vmem:[%s8 + $0x3c] sm:$0xf]
  %v1221 = vld [vmem:[%s9] sm:$0x1]
  %v1223 = vlaneseq
  %v1224 = vshrl.u32 %v1223, 7
  %v1225 = vsub.s32 0, %v1224
  %v1226 = vrot.slane %v1221, %v1225
  %v1244 = vunpack.c.l.b16 %v1205
  %v1245 = vunpack.c.l.b16 %v1206
  %v1246 = vunpack.c.l.b16 %v1207
  %v1247 = vunpack.c.l.b16 %v1208
  %v1248 = vunpack.c.l.b16 %v1209
  %v1249 = vunpack.c.l.b16 %v1210
  %v1250 = vunpack.c.l.b16 %v1211
  %v1251 = vunpack.c.l.b16 %v1212
  %v1252 = vunpack.c.l.b16 %v1213
  %v1253 = vunpack.c.l.b16 %v1214
  %v1254 = vunpack.c.l.b16 %v1215
  %v1255 = vunpack.c.l.b16 %v1216
  %v1256 = vunpack.c.l.b16 %v1217
  %v1257 = vunpack.c.l.b16 %v1218
  %v1258 = vunpack.c.l.b16 %v1219
  %v1259 = vunpack.c.l.b16 %v1220
  %v1260 = vpack.c.b16 %v1245, %v1244
  %v1261 = vpack.c.b16 %v1247, %v1246
  %v1262 = vpack.c.b16 %v1249, %v1248
  %v1263 = vpack.c.b16 %v1251, %v1250
  %v1264 = vpack.c.b16 %v1253, %v1252
  %v1265 = vpack.c.b16 %v1255, %v1254
  %v1266 = vpack.c.b16 %v1257, %v1256
  %v1267 = vpack.c.b16 %v1259, %v1258
  %1276 = vmatprep.subr.bf16.mxu0 0
  %1277 = vmatpush1.bf16.msra.mxu0 %v1260
  %1278 = vmatprep.subr.bf16.mxu0 0
  %1279 = vmatpush1.bf16.msra.mxu0 %v1261
  %1280 = vmatprep.subr.bf16.mxu0 0
  %1281 = vmatpush1.bf16.msra.mxu0 %v1262
  %1282 = vmatprep.subr.bf16.mxu0 0
  %1283 = vmatpush1.bf16.msra.mxu0 %v1263
  %1284 = vmatprep.subr.bf16.mxu0 0
  %1285 = vmatpush1.bf16.msra.mxu0 %v1264
  %1286 = vmatprep.subr.bf16.mxu0 0
  %1287 = vmatpush1.bf16.msra.mxu0 %v1265
  %1288 = vmatprep.subr.bf16.mxu0 0
  %1289 = vmatpush1.bf16.msra.mxu0 %v1266
  %1290 = vmatprep.subr.bf16.mxu0 0
  %1291 = vmatpush1.bf16.msra.mxu0 %v1267
  %1292 = vmatprep.subr.bf16.mxu0 0
  %1293 = vmatpush1.bf16.msra.mxu0 0
  %1294 = vmatprep.subr.bf16.mxu0 0
  %1295 = vmatpush1.bf16.msra.mxu0 0
  %1296 = vmatprep.subr.bf16.mxu0 0
  %1297 = vmatpush1.bf16.msra.mxu0 0
  %1298 = vmatprep.subr.bf16.mxu0 0
  %1299 = vmatpush1.bf16.msra.mxu0 0
  %1300 = vmatprep.subr.bf16.mxu0 0
  %1301 = vmatpush1.bf16.msra.mxu0 0
  %1302 = vmatprep.subr.bf16.mxu0 0
  %1303 = vmatpush1.bf16.msra.mxu0 0
  %1304 = vmatprep.subr.bf16.mxu0 0
  %1305 = vmatpush1.bf16.msra.mxu0 0
  %1306 = vmatprep.subr.bf16.mxu0 0
  %1307 = vmatpush1.bf16.msra.mxu0 0
  %1308 = vmatprep.mubr.bf16.mxu0 0
  %1309 = vmatmul.mubr.bf16.gmra.mrb[0].mxu0 %v1204
  %v1310 = vpop.f32.mrb[0].mxu0
  %v1311 = vadd.f32 %v1226, %v1310
  %v1312 = vpop.f32.mrb[0].mxu0
  %v1313 = vpop.f32.mrb[0].mxu0
  %v1314 = vpop.f32.mrb[0].mxu0
  %1315 = vdwg.mxu0
  %v1316 = vmax.f32 %v1311, 0.0
  %v1317 = vpack.c.bf16 %v1316, %v1316
  %v1318 = vld [vmem:[%s1] sm:$0xff]
  %v1319 = vld [vmem:[%s1 + $0x8] sm:$0xff]
  %v1320 = vld [vmem:[%s1 + $0x10] sm:$0xff]
  %v1321 = vpack.c.bf16 %v1318, %v1318
  %v1322 = vpack.c.bf16 %v1319, %v1319
  %v1323 = vpack.c.bf16 %v1320, %v1320
  %v1324 = vld [vmem:[%s10] sm:$0xff]
  %v1325 = vld [vmem:[%s10 + $0x8] sm:$0xf]
  %v1326 = vld [vmem:[%s10 + $0xc] sm:$0xff]
  %v1327 = vld [vmem:[%s10 + $0x14] sm:$0xf]
  %v1328 = vld [vmem:[%s10 + $0x18] sm:$0xff]
  %v1329 = vld [vmem:[%s10 + $0x20] sm:$0xf]
  %v1330 = vld [vmem:[%s10 + $0x24] sm:$0xff]
  %v1331 = vld [vmem:[%s10 + $0x2c] sm:$0xf]
  %v1332 = vld [vmem:[%s10 + $0x30] sm:$0xff]
  %v1333 = vld [vmem:[%s10 + $0x38] sm:$0xf]
  %v1334 = vld [vmem:[%s10 + $0x3c] sm:$0xff]
  %v1335 = vld [vmem:[%s10 + $0x44] sm:$0xf]
  %v1336 = vld [vmem:[%s10 + $0x48] sm:$0xff]
  %v1337 = vld [vmem:[%s10 + $0x50] sm:$0xf]
  %v1338 = vld [vmem:[%s10 + $0x54] sm:$0xff]
  %v1339 = vld [vmem:[%s10 + $0x5c] sm:$0xf]
  %v1340 = vld [vmem:[%s10 + $0x60] sm:$0xff]
  %v1341 = vld [vmem:[%s10 + $0x68] sm:$0xf]
  %v1342 = vld [vmem:[%s10 + $0x6c] sm:$0xff]
  %v1343 = vld [vmem:[%s10 + $0x74] sm:$0xf]
  %v1344 = vld [vmem:[%s10 + $0x78] sm:$0xff]
  %v1345 = vld [vmem:[%s10 + $0x80] sm:$0xf]
  %v1346 = vld [vmem:[%s10 + $0x84] sm:$0xff]
  %v1347 = vld [vmem:[%s10 + $0x8c] sm:$0xf]
  %v1348 = vld [vmem:[%s10 + $0x90] sm:$0xff]
  %v1349 = vld [vmem:[%s10 + $0x98] sm:$0xf]
  %v1350 = vld [vmem:[%s10 + $0x9c] sm:$0xff]
  %v1351 = vld [vmem:[%s10 + $0xa4] sm:$0xf]
  %v1352 = vld [vmem:[%s10 + $0xa8] sm:$0xff]
  %v1353 = vld [vmem:[%s10 + $0xb0] sm:$0xf]
  %v1354 = vld [vmem:[%s10 + $0xb4] sm:$0xff]
  %v1355 = vld [vmem:[%s10 + $0xbc] sm:$0xf]
  %v1356 = vld [vmem:[%s11] sm:$0xff]
  %v1357 = vld [vmem:[%s11 + $0x8] sm:$0xf]
  %v1358 = vld [vmem:[%s11 + $0xc] sm:$0xff]
  %v1359 = vld [vmem:[%s11 + $0x14] sm:$0xf]
  %v1360 = vld [vmem:[%s11 + $0x18] sm:$0xff]
  %v1361 = vld [vmem:[%s11 + $0x20] sm:$0xf]
  %v1362 = vld [vmem:[%s11 + $0x24] sm:$0xff]
  %v1363 = vld [vmem:[%s11 + $0x2c] sm:$0xf]
  %v1364 = vld [vmem:[%s11 + $0x30] sm:$0xff]
  %v1365 = vld [vmem:[%s11 + $0x38] sm:$0xf]
  %v1366 = vld [vmem:[%s11 + $0x3c] sm:$0xff]
  %v1367 = vld [vmem:[%s11 + $0x44] sm:$0xf]
  %v1368 = vld [vmem:[%s11 + $0x48] sm:$0xff]
  %v1369 = vld [vmem:[%s11 + $0x50] sm:$0xf]
  %v1370 = vld [vmem:[%s11 + $0x54] sm:$0xff]
  %v1371 = vld [vmem:[%s11 + $0x5c] sm:$0xf]
  %v1372 = vld [vmem:[%s11 + $0x60] sm:$0xff]
  %v1373 = vld [vmem:[%s11 + $0x68] sm:$0xf]
  %v1374 = vld [vmem:[%s11 + $0x6c] sm:$0xff]
  %v1375 = vld [vmem:[%s11 + $0x74] sm:$0xf]
  %v1376 = vld [vmem:[%s11 + $0x78] sm:$0xff]
  %v1377 = vld [vmem:[%s11 + $0x80] sm:$0xf]
  %v1378 = vld [vmem:[%s11 + $0x84] sm:$0xff]
  %v1379 = vld [vmem:[%s11 + $0x8c] sm:$0xf]
  %v1380 = vld [vmem:[%s11 + $0x90] sm:$0xff]
  %v1381 = vld [vmem:[%s11 + $0x98] sm:$0xf]
  %v1382 = vld [vmem:[%s11 + $0x9c] sm:$0xff]
  %v1383 = vld [vmem:[%s11 + $0xa4] sm:$0xf]
  %v1384 = vld [vmem:[%s11 + $0xa8] sm:$0xff]
  %v1385 = vld [vmem:[%s11 + $0xb0] sm:$0xf]
  %v1386 = vld [vmem:[%s11 + $0xb4] sm:$0xff]
  %v1387 = vld [vmem:[%s11 + $0xbc] sm:$0xf]
  %v1388 = vld [vmem:[%s11 + $0xc0] sm:$0xff]
  %v1389 = vld [vmem:[%s11 + $0xc8] sm:$0xf]
  %v1390 = vld [vmem:[%s11 + $0xcc] sm:$0xff]
  %v1391 = vld [vmem:[%s11 + $0xd4] sm:$0xf]
  %v1392 = vld [vmem:[%s11 + $0xd8] sm:$0xff]
  %v1393 = vld [vmem:[%s11 + $0xe0] sm:$0xf]
  %v1394 = vld [vmem:[%s11 + $0xe4] sm:$0xff]
  %v1395 = vld [vmem:[%s11 + $0xec] sm:$0xf]
  %v1396 = vld [vmem:[%s11 + $0xf0] sm:$0xff]
  %v1397 = vld [vmem:[%s11 + $0xf8] sm:$0xf]
  %v1398 = vld [vmem:[%s11 + $0xfc] sm:$0xff]
  %v1399 = vld [vmem:[%s11 + $0x104] sm:$0xf]
  %v1400 = vld [vmem:[%s11 + $0x108] sm:$0xff]
  %v1401 = vld [vmem:[%s11 + $0x110] sm:$0xf]
  %v1402 = vld [vmem:[%s11 + $0x114] sm:$0xff]
  %v1403 = vld [vmem:[%s11 + $0x11c] sm:$0xf]
  %v1404 = vld [vmem:[%s11 + $0x120] sm:$0xff]
  %v1405 = vld [vmem:[%s11 + $0x128] sm:$0xf]
  %v1406 = vld [vmem:[%s11 + $0x12c] sm:$0xff]
  %v1407 = vld [vmem:[%s11 + $0x134] sm:$0xf]
  %v1408 = vld [vmem:[%s11 + $0x138] sm:$0xff]
  %v1409 = vld [vmem:[%s11 + $0x140] sm:$0xf]
  %v1410 = vld [vmem:[%s11 + $0x144] sm:$0xff]
  %v1411 = vld [vmem:[%s11 + $0x14c] sm:$0xf]
  %v1412 = vld [vmem:[%s11 + $0x150] sm:$0xff]
  %v1413 = vld [vmem:[%s11 + $0x158] sm:$0xf]
  %v1414 = vld [vmem:[%s11 + $0x15c] sm:$0xff]
  %v1415 = vld [vmem:[%s11 + $0x164] sm:$0xf]
  %v1416 = vld [vmem:[%s11 + $0x168] sm:$0xff]
  %v1417 = vld [vmem:[%s11 + $0x170] sm:$0xf]
  %v1418 = vld [vmem:[%s11 + $0x174] sm:$0xff]
  %v1419 = vld [vmem:[%s11 + $0x17c] sm:$0xf]
  %v1420 = vld [vmem:[%s11 + $0x180] sm:$0xff]
  %v1421 = vld [vmem:[%s11 + $0x188] sm:$0xf]
  %v1422 = vld [vmem:[%s11 + $0x18c] sm:$0xff]
  %v1423 = vld [vmem:[%s11 + $0x194] sm:$0xf]
  %v1424 = vld [vmem:[%s11 + $0x198] sm:$0xff]
  %v1425 = vld [vmem:[%s11 + $0x1a0] sm:$0xf]
  %v1426 = vld [vmem:[%s11 + $0x1a4] sm:$0xff]
  %v1427 = vld [vmem:[%s11 + $0x1ac] sm:$0xf]
  %v1428 = vld [vmem:[%s11 + $0x1b0] sm:$0xff]
  %v1429 = vld [vmem:[%s11 + $0x1b8] sm:$0xf]
  %v1430 = vld [vmem:[%s11 + $0x1bc] sm:$0xff]
  %v1431 = vld [vmem:[%s11 + $0x1c4] sm:$0xf]
  %v1432 = vld [vmem:[%s11 + $0x1c8] sm:$0xff]
  %v1433 = vld [vmem:[%s11 + $0x1d0] sm:$0xf]
  %v1434 = vld [vmem:[%s11 + $0x1d4] sm:$0xff]
  %v1435 = vld [vmem:[%s11 + $0x1dc] sm:$0xf]
  %v1436 = vld [vmem:[%s11 + $0x1e0] sm:$0xff]
  %v1437 = vld [vmem:[%s11 + $0x1e8] sm:$0xf]
  %v1438 = vld [vmem:[%s11 + $0x1ec] sm:$0xff]
  %v1439 = vld [vmem:[%s11 + $0x1f4] sm:$0xf]
  %v1440 = vld [vmem:[%s11 + $0x1f8] sm:$0xff]
  %v1441 = vld [vmem:[%s11 + $0x200] sm:$0xf]
  %v1442 = vld [vmem:[%s11 + $0x204] sm:$0xff]
  %v1443 = vld [vmem:[%s11 + $0x20c] sm:$0xf]
  %v1444 = vld [vmem:[%s11 + $0x210] sm:$0xff]
  %v1445 = vld [vmem:[%s11 + $0x218] sm:$0xf]
  %v1446 = vld [vmem:[%s11 + $0x21c] sm:$0xff]
  %v1447 = vld [vmem:[%s11 + $0x224] sm:$0xf]
  %v1448 = vld [vmem:[%s11 + $0x228] sm:$0xff]
  %v1449 = vld [vmem:[%s11 + $0x230] sm:$0xf]
  %v1450 = vld [vmem:[%s11 + $0x234] sm:$0xff]
  %v1451 = vld [vmem:[%s11 + $0x23c] sm:$0xf]
  %v1548 = vunpack.c.l.b16 %v1356
  %v1549 = vunpack.c.h.b16 %v1356
  %v1550 = vunpack.c.l.b16 %v1357
  %v1551 = vunpack.c.l.b16 %v1358
  %v1552 = vunpack.c.h.b16 %v1358
  %v1553 = vunpack.c.l.b16 %v1359
  %v1554 = vunpack.c.l.b16 %v1360
  %v1555 = vunpack.c.h.b16 %v1360
  %v1556 = vunpack.c.l.b16 %v1361
  %v1557 = vunpack.c.l.b16 %v1362
  %v1558 = vunpack.c.h.b16 %v1362
  %v1559 = vunpack.c.l.b16 %v1363
  %v1560 = vunpack.c.l.b16 %v1364
  %v1561 = vunpack.c.h.b16 %v1364
  %v1562 = vunpack.c.l.b16 %v1365
  %v1563 = vunpack.c.l.b16 %v1366
  %v1564 = vunpack.c.h.b16 %v1366
  %v1565 = vunpack.c.l.b16 %v1367
  %v1566 = vunpack.c.l.b16 %v1368
  %v1567 = vunpack.c.h.b16 %v1368
  %v1568 = vunpack.c.l.b16 %v1369
  %v1569 = vunpack.c.l.b16 %v1370
  %v1570 = vunpack.c.h.b16 %v1370
  %v1571 = vunpack.c.l.b16 %v1371
  %v1572 = vunpack.c.l.b16 %v1372
  %v1573 = vunpack.c.h.b16 %v1372
  %v1574 = vunpack.c.l.b16 %v1373
  %v1575 = vunpack.c.l.b16 %v1374
  %v1576 = vunpack.c.h.b16 %v1374
  %v1577 = vunpack.c.l.b16 %v1375
  %v1578 = vunpack.c.l.b16 %v1376
  %v1579 = vunpack.c.h.b16 %v1376
  %v1580 = vunpack.c.l.b16 %v1377
  %v1581 = vunpack.c.l.b16 %v1378
  %v1582 = vunpack.c.h.b16 %v1378
  %v1583 = vunpack.c.l.b16 %v1379
  %v1584 = vunpack.c.l.b16 %v1380
  %v1585 = vunpack.c.h.b16 %v1380
  %v1586 = vunpack.c.l.b16 %v1381
  %v1587 = vunpack.c.l.b16 %v1382
  %v1588 = vunpack.c.h.b16 %v1382
  %v1589 = vunpack.c.l.b16 %v1383
  %v1590 = vunpack.c.l.b16 %v1384
  %v1591 = vunpack.c.h.b16 %v1384
  %v1592 = vunpack.c.l.b16 %v1385
  %v1593 = vunpack.c.l.b16 %v1386
  %v1594 = vunpack.c.h.b16 %v1386
  %v1595 = vunpack.c.l.b16 %v1387
  %v1596 = vunpack.c.l.b16 %v1388
  %v1597 = vunpack.c.h.b16 %v1388
  %v1598 = vunpack.c.l.b16 %v1389
  %v1599 = vunpack.c.l.b16 %v1390
  %v1600 = vunpack.c.h.b16 %v1390
  %v1601 = vunpack.c.l.b16 %v1391
  %v1602 = vunpack.c.l.b16 %v1392
  %v1603 = vunpack.c.h.b16 %v1392
  %v1604 = vunpack.c.l.b16 %v1393
  %v1605 = vunpack.c.l.b16 %v1394
  %v1606 = vunpack.c.h.b16 %v1394
  %v1607 = vunpack.c.l.b16 %v1395
  %v1608 = vunpack.c.l.b16 %v1396
  %v1609 = vunpack.c.h.b16 %v1396
  %v1610 = vunpack.c.l.b16 %v1397
  %v1611 = vunpack.c.l.b16 %v1398
  %v1612 = vunpack.c.h.b16 %v1398
  %v1613 = vunpack.c.l.b16 %v1399
  %v1614 = vunpack.c.l.b16 %v1400
  %v1615 = vunpack.c.h.b16 %v1400
  %v1616 = vunpack.c.l.b16 %v1401
  %v1617 = vunpack.c.l.b16 %v1402
  %v1618 = vunpack.c.h.b16 %v1402
  %v1619 = vunpack.c.l.b16 %v1403
  %v1620 = vunpack.c.l.b16 %v1404
  %v1621 = vunpack.c.h.b16 %v1404
  %v1622 = vunpack.c.l.b16 %v1405
  %v1623 = vunpack.c.l.b16 %v1406
  %v1624 = vunpack.c.h.b16 %v1406
  %v1625 = vunpack.c.l.b16 %v1407
  %v1626 = vunpack.c.l.b16 %v1408
  %v1627 = vunpack.c.h.b16 %v1408
  %v1628 = vunpack.c.l.b16 %v1409
  %v1629 = vunpack.c.l.b16 %v1410
  %v1630 = vunpack.c.h.b16 %v1410
  %v1631 = vunpack.c.l.b16 %v1411
  %v1632 = vunpack.c.l.b16 %v1412
  %v1633 = vunpack.c.h.b16 %v1412
  %v1634 = vunpack.c.l.b16 %v1413
  %v1635 = vunpack.c.l.b16 %v1414
  %v1636 = vunpack.c.h.b16 %v1414
  %v1637 = vunpack.c.l.b16 %v1415
  %v1638 = vunpack.c.l.b16 %v1416
  %v1639 = vunpack.c.h.b16 %v1416
  %v1640 = vunpack.c.l.b16 %v1417
  %v1641 = vunpack.c.l.b16 %v1418
  %v1642 = vunpack.c.h.b16 %v1418
  %v1643 = vunpack.c.l.b16 %v1419
  %v1644 = vunpack.c.l.b16 %v1420
  %v1645 = vunpack.c.h.b16 %v1420
  %v1646 = vunpack.c.l.b16 %v1421
  %v1647 = vunpack.c.l.b16 %v1422
  %v1648 = vunpack.c.h.b16 %v1422
  %v1649 = vunpack.c.l.b16 %v1423
  %v1650 = vunpack.c.l.b16 %v1424
  %v1651 = vunpack.c.h.b16 %v1424
  %v1652 = vunpack.c.l.b16 %v1425
  %v1653 = vunpack.c.l.b16 %v1426
  %v1654 = vunpack.c.h.b16 %v1426
  %v1655 = vunpack.c.l.b16 %v1427
  %v1656 = vunpack.c.l.b16 %v1428
  %v1657 = vunpack.c.h.b16 %v1428
  %v1658 = vunpack.c.l.b16 %v1429
  %v1659 = vunpack.c.l.b16 %v1430
  %v1660 = vunpack.c.h.b16 %v1430
  %v1661 = vunpack.c.l.b16 %v1431
  %v1662 = vunpack.c.l.b16 %v1432
  %v1663 = vunpack.c.h.b16 %v1432
  %v1664 = vunpack.c.l.b16 %v1433
  %v1665 = vunpack.c.l.b16 %v1434
  %v1666 = vunpack.c.h.b16 %v1434
  %v1667 = vunpack.c.l.b16 %v1435
  %v1668 = vunpack.c.l.b16 %v1436
  %v1669 = vunpack.c.h.b16 %v1436
  %v1670 = vunpack.c.l.b16 %v1437
  %v1671 = vunpack.c.l.b16 %v1438
  %v1672 = vunpack.c.h.b16 %v1438
  %v1673 = vunpack.c.l.b16 %v1439
  %v1674 = vunpack.c.l.b16 %v1440
  %v1675 = vunpack.c.h.b16 %v1440
  %v1676 = vunpack.c.l.b16 %v1441
  %v1677 = vunpack.c.l.b16 %v1442
  %v1678 = vunpack.c.h.b16 %v1442
  %v1679 = vunpack.c.l.b16 %v1443
  %v1680 = vunpack.c.l.b16 %v1444
  %v1681 = vunpack.c.h.b16 %v1444
  %v1682 = vunpack.c.l.b16 %v1445
  %v1683 = vunpack.c.l.b16 %v1446
  %v1684 = vunpack.c.h.b16 %v1446
  %v1685 = vunpack.c.l.b16 %v1447
  %v1686 = vunpack.c.l.b16 %v1448
  %v1687 = vunpack.c.h.b16 %v1448
  %v1688 = vunpack.c.l.b16 %v1449
  %v1689 = vunpack.c.l.b16 %v1450
  %v1690 = vunpack.c.h.b16 %v1450
  %v1691 = vunpack.c.l.b16 %v1451
  %v1692 = vpack.c.b16 %v1551, %v1548
  %v1693 = vpack.c.b16 %v1552, %v1549
  %v1694 = vpack.c.b16 %v1553, %v1550
  %v1695 = vpack.c.b16 %v1557, %v1554
  %v1696 = vpack.c.b16 %v1558, %v1555
  %v1697 = vpack.c.b16 %v1559, %v1556
  %v1698 = vpack.c.b16 %v1563, %v1560
  %v1699 = vpack.c.b16 %v1564, %v1561
  %v1700 = vpack.c.b16 %v1565, %v1562
  %v1701 = vpack.c.b16 %v1569, %v1566
  %v1702 = vpack.c.b16 %v1570, %v1567
  %v1703 = vpack.c.b16 %v1571, %v1568
  %v1704 = vpack.c.b16 %v1575, %v1572
  %v1705 = vpack.c.b16 %v1576, %v1573
  %v1706 = vpack.c.b16 %v1577, %v1574
  %v1707 = vpack.c.b16 %v1581, %v1578
  %v1708 = vpack.c.b16 %v1582, %v1579
  %v1709 = vpack.c.b16 %v1583, %v1580
  %v1710 = vpack.c.b16 %v1587, %v1584
  %v1711 = vpack.c.b16 %v1588, %v1585
  %v1712 = vpack.c.b16 %v1589, %v1586
  %v1713 = vpack.c.b16 %v1593, %v1590
  %v1714 = vpack.c.b16 %v1594, %v1591
  %v1715 = vpack.c.b16 %v1595, %v1592
  %v1716 = vpack.c.b16 %v1599, %v1596
  %v1717 = vpack.c.b16 %v1600, %v1597
  %v1718 = vpack.c.b16 %v1601, %v1598
  %v1719 = vpack.c.b16 %v1605, %v1602
  %v1720 = vpack.c.b16 %v1606, %v1603
  %v1721 = vpack.c.b16 %v1607, %v1604
  %v1722 = vpack.c.b16 %v1611, %v1608
  %v1723 = vpack.c.b16 %v1612, %v1609
  %v1724 = vpack.c.b16 %v1613, %v1610
  %v1725 = vpack.c.b16 %v1617, %v1614
  %v1726 = vpack.c.b16 %v1618, %v1615
  %v1727 = vpack.c.b16 %v1619, %v1616
  %v1728 = vpack.c.b16 %v1623, %v1620
  %v1729 = vpack.c.b16 %v1624, %v1621
  %v1730 = vpack.c.b16 %v1625, %v1622
  %v1731 = vpack.c.b16 %v1629, %v1626
  %v1732 = vpack.c.b16 %v1630, %v1627
  %v1733 = vpack.c.b16 %v1631, %v1628
  %v1734 = vpack.c.b16 %v1635, %v1632
  %v1735 = vpack.c.b16 %v1636, %v1633
  %v1736 = vpack.c.b16 %v1637, %v1634
  %v1737 = vpack.c.b16 %v1641, %v1638
  %v1738 = vpack.c.b16 %v1642, %v1639
  %v1739 = vpack.c.b16 %v1643, %v1640
  %v1740 = vpack.c.b16 %v1647, %v1644
  %v1741 = vpack.c.b16 %v1648, %v1645
  %v1742 = vpack.c.b16 %v1649, %v1646
  %v1743 = vpack.c.b16 %v1653, %v1650
  %v1744 = vpack.c.b16 %v1654, %v1651
  %v1745 = vpack.c.b16 %v1655, %v1652
  %v1746 = vpack.c.b16 %v1659, %v1656
  %v1747 = vpack.c.b16 %v1660, %v1657
  %v1748 = vpack.c.b16 %v1661, %v1658
  %v1749 = vpack.c.b16 %v1665, %v1662
  %v1750 = vpack.c.b16 %v1666, %v1663
  %v1751 = vpack.c.b16 %v1667, %v1664
  %v1752 = vpack.c.b16 %v1671, %v1668
  %v1753 = vpack.c.b16 %v1672, %v1669
  %v1754 = vpack.c.b16 %v1673, %v1670
  %v1755 = vpack.c.b16 %v1677, %v1674
  %v1756 = vpack.c.b16 %v1678, %v1675
  %v1757 = vpack.c.b16 %v1679, %v1676
  %v1758 = vpack.c.b16 %v1683, %v1680
  %v1759 = vpack.c.b16 %v1684, %v1681
  %v1760 = vpack.c.b16 %v1685, %v1682
  %v1761 = vpack.c.b16 %v1689, %v1686
  %v1762 = vpack.c.b16 %v1690, %v1687
  %v1763 = vpack.c.b16 %v1691, %v1688
  %1836 = vmatprep.subr.bf16.mxu0 %v1693
  %1837 = vmatpush1.bf16.msra.mxu0 %v1692
  %1838 = vmatprep.subr.bf16.mxu0 %v1696
  %1839 = vmatpush1.bf16.msra.mxu0 %v1695
  %1840 = vmatprep.subr.bf16.mxu0 %v1699
  %1841 = vmatpush1.bf16.msra.mxu0 %v1698
  %1842 = vmatprep.subr.bf16.mxu0 %v1702
  %1843 = vmatpush1.bf16.msra.mxu0 %v1701
  %1844 = vmatprep.subr.bf16.mxu0 %v1705
  %1845 = vmatpush1.bf16.msra.mxu0 %v1704
  %1846 = vmatprep.subr.bf16.mxu0 %v1708
  %1847 = vmatpush1.bf16.msra.mxu0 %v1707
  %1848 = vmatprep.subr.bf16.mxu0 %v1711
  %1849 = vmatpush1.bf16.msra.mxu0 %v1710
  %1850 = vmatprep.subr.bf16.mxu0 %v1714
  %1851 = vmatpush1.bf16.msra.mxu0 %v1713
  %1852 = vmatprep.subr.bf16.mxu0 %v1717
  %1853 = vmatpush1.bf16.msra.mxu0 %v1716
  %1854 = vmatprep.subr.bf16.mxu0 %v1720
  %1855 = vmatpush1.bf16.msra.mxu0 %v1719
  %1856 = vmatprep.subr.bf16.mxu0 %v1723
  %1857 = vmatpush1.bf16.msra.mxu0 %v1722
  %1858 = vmatprep.subr.bf16.mxu0 %v1726
  %1859 = vmatpush1.bf16.msra.mxu0 %v1725
  %1860 = vmatprep.subr.bf16.mxu0 %v1729
  %1861 = vmatpush1.bf16.msra.mxu0 %v1728
  %1862 = vmatprep.subr.bf16.mxu0 %v1732
  %1863 = vmatpush1.bf16.msra.mxu0 %v1731
  %1864 = vmatprep.subr.bf16.mxu0 %v1735
  %1865 = vmatpush1.bf16.msra.mxu0 %v1734
  %1866 = vmatprep.subr.bf16.mxu0 %v1738
  %1867 = vmatpush1.bf16.msra.mxu0 %v1737
  %1868 = vmatprep.mubr.bf16.mxu0 %v1322
  %1869 = vmatmul.mubr.bf16.gmra.mrb[0].mxu0 %v1321
  %v1870 = vpop.f32.mrb[0].mxu0
  %v1871 = vadd.f32 0.0, %v1870
  %v1872 = vpop.f32.mrb[0].mxu0
  %v1873 = vadd.f32 0.0, %v1872
  %v1874 = vpop.f32.mrb[0].mxu0
  %v1875 = vpop.f32.mrb[0].mxu0
  %1876 = vdwg.mxu0
  %1877 = vmatprep.subr.bf16.mxu0 %v1741
  %1878 = vmatpush1.bf16.msra.mxu0 %v1740
  %1879 = vmatprep.subr.bf16.mxu0 %v1744
  %1880 = vmatpush1.bf16.msra.mxu0 %v1743
  %1881 = vmatprep.subr.bf16.mxu0 %v1747
  %1882 = vmatpush1.bf16.msra.mxu0 %v1746
  %1883 = vmatprep.subr.bf16.mxu0 %v1750
  %1884 = vmatpush1.bf16.msra.mxu0 %v1749
  %1885 = vmatprep.subr.bf16.mxu0 %v1753
  %1886 = vmatpush1.bf16.msra.mxu0 %v1752
  %1887 = vmatprep.subr.bf16.mxu0 %v1756
  %1888 = vmatpush1.bf16.msra.mxu0 %v1755
  %1889 = vmatprep.subr.bf16.mxu0 %v1759
  %1890 = vmatpush1.bf16.msra.mxu0 %v1758
  %1891 = vmatprep.subr.bf16.mxu0 %v1762
  %1892 = vmatpush1.bf16.msra.mxu0 %v1761
  %1893 = vmatprep.subr.bf16.mxu0 0
  %1894 = vmatpush1.bf16.msra.mxu0 0
  %1895 = vmatprep.subr.bf16.mxu0 0
  %1896 = vmatpush1.bf16.msra.mxu0 0
  %1897 = vmatprep.subr.bf16.mxu0 0
  %1898 = vmatpush1.bf16.msra.mxu0 0
  %1899 = vmatprep.subr.bf16.mxu0 0
  %1900 = vmatpush1.bf16.msra.mxu0 0
  %1901 = vmatprep.subr.bf16.mxu0 0
  %1902 = vmatpush1.bf16.msra.mxu0 0
  %1903 = vmatprep.subr.bf16.mxu0 0
  %1904 = vmatpush1.bf16.msra.mxu0 0
  %1905 = vmatprep.subr.bf16.mxu0 0
  %1906 = vmatpush1.bf16.msra.mxu0 0
  %1907 = vmatprep.subr.bf16.mxu0 0
  %1908 = vmatpush1.bf16.msra.mxu0 0
  %1909 = vmatprep.mubr.bf16.mxu0 0
  %1910 = vmatmul.mubr.bf16.gmra.mrb[0].mxu0 %v1323
  %v1911 = vpop.f32.mrb[0].mxu0
  %v1912 = vadd.f32 %v1871, %v1911
  %v1913 = vpop.f32.mrb[0].mxu0
  %v1914 = vadd.f32 %v1873, %v1913
  %v1915 = vpop.f32.mrb[0].mxu0
  %v1916 = vpop.f32.mrb[0].mxu0
  %1917 = vdwg.mxu0
  %1918 = vmatprep.subr.bf16.mxu0 0
  %1919 = vmatpush1.bf16.msra.mxu0 %v1694
  %1920 = vmatprep.subr.bf16.mxu0 0
  %1921 = vmatpush1.bf16.msra.mxu0 %v1697
  %1922 = vmatprep.subr.bf16.mxu0 0
  %1923 = vmatpush1.bf16.msra.mxu0 %v1700
  %1924 = vmatprep.subr.bf16.mxu0 0
  %1925 = vmatpush1.bf16.msra.mxu0 %v1703
  %1926 = vmatprep.subr.bf16.mxu0 0
  %1927 = vmatpush1.bf16.msra.mxu0 %v1706
  %1928 = vmatprep.subr.bf16.mxu0 0
  %1929 = vmatpush1.bf16.msra.mxu0 %v1709
  %1930 = vmatprep.subr.bf16.mxu0 0
  %1931 = vmatpush1.bf16.msra.mxu0 %v1712
  %1932 = vmatprep.subr.bf16.mxu0 0
  %1933 = vmatpush1.bf16.msra.mxu0 %v1715
  %1934 = vmatprep.subr.bf16.mxu0 0
  %1935 = vmatpush1.bf16.msra.mxu0 %v1718
  %1936 = vmatprep.subr.bf16.mxu0 0
  %1937 = vmatpush1.bf16.msra.mxu0 %v1721
  %1938 = vmatprep.subr.bf16.mxu0 0
  %1939 = vmatpush1.bf16.msra.mxu0 %v1724
  %1940 = vmatprep.subr.bf16.mxu0 0
  %1941 = vmatpush1.bf16.msra.mxu0 %v1727
  %1942 = vmatprep.subr.bf16.mxu0 0
  %1943 = vmatpush1.bf16.msra.mxu0 %v1730
  %1944 = vmatprep.subr.bf16.mxu0 0
  %1945 = vmatpush1.bf16.msra.mxu0 %v1733
  %1946 = vmatprep.subr.bf16.mxu0 0
  %1947 = vmatpush1.bf16.msra.mxu0 %v1736
  %1948 = vmatprep.subr.bf16.mxu0 0
  %1949 = vmatpush1.bf16.msra.mxu0 %v1739
  %1950 = vmatprep.mubr.bf16.mxu0 %v1322
  %1951 = vmatmul.mubr.bf16.gmra.mrb[0].mxu0 %v1321
  %v1952 = vpop.f32.mrb[0].mxu0
  %v1953 = vadd.f32 0.0, %v1952
  %v1954 = vpop.f32.mrb[0].mxu0
  %v1955 = vpop.f32.mrb[0].mxu0
  %v1956 = vpop.f32.mrb[0].mxu0
  %1957 = vdwg.mxu0
  %1958 = vmatprep.subr.bf16.mxu0 0
  %1959 = vmatpush1.bf16.msra.mxu0 %v1742
  %1960 = vmatprep.subr.bf16.mxu0 0
  %1961 = vmatpush1.bf16.msra.mxu0 %v1745
  %1962 = vmatprep.subr.bf16.mxu0 0
  %1963 = vmatpush1.bf16.msra.mxu0 %v1748
  %1964 = vmatprep.subr.bf16.mxu0 0
  %1965 = vmatpush1.bf16.msra.mxu0 %v1751
  %1966 = vmatprep.subr.bf16.mxu0 0
  %1967 = vmatpush1.bf16.msra.mxu0 %v1754
  %1968 = vmatprep.subr.bf16.mxu0 0
  %1969 = vmatpush1.bf16.msra.mxu0 %v1757
  %1970 = vmatprep.subr.bf16.mxu0 0
  %1971 = vmatpush1.bf16.msra.mxu0 %v1760
  %1972 = vmatprep.subr.bf16.mxu0 0
  %1973 = vmatpush1.bf16.msra.mxu0 %v1763
  %1974 = vmatprep.subr.bf16.mxu0 0
  %1975 = vmatpush1.bf16.msra.mxu0 0
  %1976 = vmatprep.subr.bf16.mxu0 0
  %1977 = vmatpush1.bf16.msra.mxu0 0
  %1978 = vmatprep.subr.bf16.mxu0 0
  %1979 = vmatpush1.bf16.msra.mxu0 0
  %1980 = vmatprep.subr.bf16.mxu0 0
  %1981 = vmatpush1.bf16.msra.mxu0 0
  %1982 = vmatprep.subr.bf16.mxu0 0
  %1983 = vmatpush1.bf16.msra.mxu0 0
  %1984 = vmatprep.subr.bf16.mxu0 0
  %1985 = vmatpush1.bf16.msra.mxu0 0
  %1986 = vmatprep.subr.bf16.mxu0 0
  %1987 = vmatpush1.bf16.msra.mxu0 0
  %1988 = vmatprep.subr.bf16.mxu0 0
  %1989 = vmatpush1.bf16.msra.mxu0 0
  %1990 = vmatprep.mubr.bf16.mxu0 0
  %1991 = vmatmul.mubr.bf16.gmra.mrb[0].mxu0 %v1323
  %v1992 = vpop.f32.mrb[0].mxu0
  %v1993 = vadd.f32 %v1953, %v1992
  %v1994 = vpop.f32.mrb[0].mxu0
  %v1995 = vpop.f32.mrb[0].mxu0
  %v1996 = vpop.f32.mrb[0].mxu0
  %1997 = vdwg.mxu0
  %v2030 = vunpack.c.l.b16 %v1324
  %v2031 = vunpack.c.h.b16 %v1324
  %v2032 = vunpack.c.l.b16 %v1325
  %v2033 = vunpack.c.l.b16 %v1326
  %v2034 = vunpack.c.h.b16 %v1326
  %v2035 = vunpack.c.l.b16 %v1327
  %v2036 = vunpack.c.l.b16 %v1328
  %v2037 = vunpack.c.h.b16 %v1328
  %v2038 = vunpack.c.l.b16 %v1329
  %v2039 = vunpack.c.l.b16 %v1330
  %v2040 = vunpack.c.h.b16 %v1330
  %v2041 = vunpack.c.l.b16 %v1331
  %v2042 = vunpack.c.l.b16 %v1332
  %v2043 = vunpack.c.h.b16 %v1332
  %v2044 = vunpack.c.l.b16 %v1333
  %v2045 = vunpack.c.l.b16 %v1334
  %v2046 = vunpack.c.h.b16 %v1334
  %v2047 = vunpack.c.l.b16 %v1335
  %v2048 = vunpack.c.l.b16 %v1336
  %v2049 = vunpack.c.h.b16 %v1336
  %v2050 = vunpack.c.l.b16 %v1337
  %v2051 = vunpack.c.l.b16 %v1338
  %v2052 = vunpack.c.h.b16 %v1338
  %v2053 = vunpack.c.l.b16 %v1339
  %v2054 = vunpack.c.l.b16 %v1340
  %v2055 = vunpack.c.h.b16 %v1340
  %v2056 = vunpack.c.l.b16 %v1341
  %v2057 = vunpack.c.l.b16 %v1342
  %v2058 = vunpack.c.h.b16 %v1342
  %v2059 = vunpack.c.l.b16 %v1343
  %v2060 = vunpack.c.l.b16 %v1344
  %v2061 = vunpack.c.h.b16 %v1344
  %v2062 = vunpack.c.l.b16 %v1345
  %v2063 = vunpack.c.l.b16 %v1346
  %v2064 = vunpack.c.h.b16 %v1346
  %v2065 = vunpack.c.l.b16 %v1347
  %v2066 = vunpack.c.l.b16 %v1348
  %v2067 = vunpack.c.h.b16 %v1348
  %v2068 = vunpack.c.l.b16 %v1349
  %v2069 = vunpack.c.l.b16 %v1350
  %v2070 = vunpack.c.h.b16 %v1350
  %v2071 = vunpack.c.l.b16 %v1351
  %v2072 = vunpack.c.l.b16 %v1352
  %v2073 = vunpack.c.h.b16 %v1352
  %v2074 = vunpack.c.l.b16 %v1353
  %v2075 = vunpack.c.l.b16 %v1354
  %v2076 = vunpack.c.h.b16 %v1354
  %v2077 = vunpack.c.l.b16 %v1355
  %v2078 = vpack.c.b16 %v2033, %v2030
  %v2079 = vpack.c.b16 %v2034, %v2031
  %v2080 = vpack.c.b16 %v2035, %v2032
  %v2081 = vpack.c.b16 %v2039, %v2036
  %v2082 = vpack.c.b16 %v2040, %v2037
  %v2083 = vpack.c.b16 %v2041, %v2038
  %v2084 = vpack.c.b16 %v2045, %v2042
  %v2085 = vpack.c.b16 %v2046, %v2043
  %v2086 = vpack.c.b16 %v2047, %v2044
  %v2087 = vpack.c.b16 %v2051, %v2048
  %v2088 = vpack.c.b16 %v2052, %v2049
  %v2089 = vpack.c.b16 %v2053, %v2050
  %v2090 = vpack.c.b16 %v2057, %v2054
  %v2091 = vpack.c.b16 %v2058, %v2055
  %v2092 = vpack.c.b16 %v2059, %v2056
  %v2093 = vpack.c.b16 %v2063, %v2060
  %v2094 = vpack.c.b16 %v2064, %v2061
  %v2095 = vpack.c.b16 %v2065, %v2062
  %v2096 = vpack.c.b16 %v2069, %v2066
  %v2097 = vpack.c.b16 %v2070, %v2067
  %v2098 = vpack.c.b16 %v2071, %v2068
  %v2099 = vpack.c.b16 %v2075, %v2072
  %v2100 = vpack.c.b16 %v2076, %v2073
  %v2101 = vpack.c.b16 %v2077, %v2074
  %2126 = vmatprep.subr.bf16.mxu0 %v2079
  %2127 = vmatpush1.bf16.msra.mxu0 %v2078
  %2128 = vmatprep.subr.bf16.mxu0 %v2082
  %2129 = vmatpush1.bf16.msra.mxu0 %v2081
  %2130 = vmatprep.subr.bf16.mxu0 %v2085
  %2131 = vmatpush1.bf16.msra.mxu0 %v2084
  %2132 = vmatprep.subr.bf16.mxu0 %v2088
  %2133 = vmatpush1.bf16.msra.mxu0 %v2087
  %2134 = vmatprep.subr.bf16.mxu0 %v2091
  %2135 = vmatpush1.bf16.msra.mxu0 %v2090
  %2136 = vmatprep.subr.bf16.mxu0 %v2094
  %2137 = vmatpush1.bf16.msra.mxu0 %v2093
  %2138 = vmatprep.subr.bf16.mxu0 %v2097
  %2139 = vmatpush1.bf16.msra.mxu0 %v2096
  %2140 = vmatprep.subr.bf16.mxu0 %v2100
  %2141 = vmatpush1.bf16.msra.mxu0 %v2099
  %2142 = vmatprep.subr.bf16.mxu0 0
  %2143 = vmatpush1.bf16.msra.mxu0 0
  %2144 = vmatprep.subr.bf16.mxu0 0
  %2145 = vmatpush1.bf16.msra.mxu0 0
  %2146 = vmatprep.subr.bf16.mxu0 0
  %2147 = vmatpush1.bf16.msra.mxu0 0
  %2148 = vmatprep.subr.bf16.mxu0 0
  %2149 = vmatpush1.bf16.msra.mxu0 0
  %2150 = vmatprep.subr.bf16.mxu0 0
  %2151 = vmatpush1.bf16.msra.mxu0 0
  %2152 = vmatprep.subr.bf16.mxu0 0
  %2153 = vmatpush1.bf16.msra.mxu0 0
  %2154 = vmatprep.subr.bf16.mxu0 0
  %2155 = vmatpush1.bf16.msra.mxu0 0
  %2156 = vmatprep.subr.bf16.mxu0 0
  %2157 = vmatpush1.bf16.msra.mxu0 0
  %2158 = vmatprep.mubr.bf16.mxu0 0
  %2159 = vmatmul.mubr.bf16.gmra.mrb[0].mxu0 %v1317
  %v2160 = vpop.f32.mrb[0].mxu0
  %v2161 = vadd.f32 %v1912, %v2160
  %v2162 = vpop.f32.mrb[0].mxu0
  %v2163 = vadd.f32 %v1914, %v2162
  %v2164 = vpop.f32.mrb[0].mxu0
  %v2165 = vpop.f32.mrb[0].mxu0
  %2166 = vdwg.mxu0
  %2167 = vmatprep.subr.bf16.mxu0 0
  %2168 = vmatpush1.bf16.msra.mxu0 %v2080
  %2169 = vmatprep.subr.bf16.mxu0 0
  %2170 = vmatpush1.bf16.msra.mxu0 %v2083
  %2171 = vmatprep.subr.bf16.mxu0 0
  %2172 = vmatpush1.bf16.msra.mxu0 %v2086
  %2173 = vmatprep.subr.bf16.mxu0 0
  %2174 = vmatpush1.bf16.msra.mxu0 %v2089
  %2175 = vmatprep.subr.bf16.mxu0 0
  %2176 = vmatpush1.bf16.msra.mxu0 %v2092
  %2177 = vmatprep.subr.bf16.mxu0 0
  %2178 = vmatpush1.bf16.msra.mxu0 %v2095
  %2179 = vmatprep.subr.bf16.mxu0 0
  %2180 = vmatpush1.bf16.msra.mxu0 %v2098
  %2181 = vmatprep.subr.bf16.mxu0 0
  %2182 = vmatpush1.bf16.msra.mxu0 %v2101
  %2183 = vmatprep.subr.bf16.mxu0 0
  %2184 = vmatpush1.bf16.msra.mxu0 0
  %2185 = vmatprep.subr.bf16.mxu0 0
  %2186 = vmatpush1.bf16.msra.mxu0 0
  %2187 = vmatprep.subr.bf16.mxu0 0
  %2188 = vmatpush1.bf16.msra.mxu0 0
  %2189 = vmatprep.subr.bf16.mxu0 0
  %2190 = vmatpush1.bf16.msra.mxu0 0
  %2191 = vmatprep.subr.bf16.mxu0 0
  %2192 = vmatpush1.bf16.msra.mxu0 0
  %2193 = vmatprep.subr.bf16.mxu0 0
  %2194 = vmatpush1.bf16.msra.mxu0 0
  %2195 = vmatprep.subr.bf16.mxu0 0
  %2196 = vmatpush1.bf16.msra.mxu0 0
  %2197 = vmatprep.subr.bf16.mxu0 0
  %2198 = vmatpush1.bf16.msra.mxu0 0
  %2199 = vmatprep.mubr.bf16.mxu0 0
  %2200 = vmatmul.mubr.bf16.gmra.mrb[0].mxu0 %v1317
  %v2201 = vpop.f32.mrb[0].mxu0
  %v2202 = vadd.f32 %v1993, %v2201
  %v2203 = vpop.f32.mrb[0].mxu0
  %v2204 = vpop.f32.mrb[0].mxu0
  %v2205 = vpop.f32.mrb[0].mxu0
  %2206 = vdwg.mxu0
  %v2207 = vld [vmem:[%s12] sm:$0x7]
  %v2209 = vlaneseq
  %v2210 = vshrl.u32 %v2209, 7
  %v2211 = vsub.s32 0, %v2210
  %v2212 = vrot.slane %v2207, %v2211
  %v2213 = vlaneseq
  %v2214 = vshrl.u32 %v2213, 7
  %v2215 = vsub.s32 1, %v2214
  %v2216 = vrot.slane %v2207, %v2215
  %v2217 = vlaneseq
  %v2218 = vshrl.u32 %v2217, 7
  %v2219 = vsub.s32 2, %v2218
  %v2220 = vrot.slane %v2207, %v2219
  %v2224 = vadd.f32 %v2161, %v2212
  %v2225 = vadd.f32 %v2163, %v2216
  %v2226 = vadd.f32 %v2202, %v2220
  %v2227 = vld [vmem:[%s2] sm:$0xff]
  %v2228 = vld [vmem:[%s2 + $0x8] sm:$0xff]
  %v2229 = vld [vmem:[%s2 + $0x10] sm:$0xff]
  %v2230 = vadd.f32 %v2224, %v2227
  %v2231 = vadd.f32 %v2225, %v2228
  %v2232 = vadd.f32 %v2226, %v2229
  %v2233 = vtanh.pop %v2230
  %v2234 = vtanh.pop %v2231
  %v2235 = vtanh.pop %v2232
  %2236 = vst [vmem:[%s21] sm:$0xff] %v2233
  %2237 = vst [vmem:[%s21 + $0x8] sm:$0xff] %v2234
  %2238 = vst [vmem:[%s21 + $0x10] sm:$0xff] %v2235
  %v2239 = vpack.c.bf16 %v2233, %v2233
  %v2240 = vpack.c.bf16 %v2234, %v2234
  %v2241 = vpack.c.bf16 %v2235, %v2235
  %v2242 = vld [vmem:[%s3] sm:$0xff]
  %v2243 = vld [vmem:[%s13] sm:$0xff]
  %v2244 = vld [vmem:[%s13 + $0x8] sm:$0xff]
  %v2245 = vld [vmem:[%s13 + $0x10] sm:$0xff]
  %v2246 = vld [vmem:[%s13 + $0x18] sm:$0xff]
  %v2247 = vld [vmem:[%s13 + $0x20] sm:$0xff]
  %v2248 = vld [vmem:[%s13 + $0x28] sm:$0xff]
  %v2249 = vld [vmem:[%s13 + $0x30] sm:$0xff]
  %v2250 = vld [vmem:[%s13 + $0x38] sm:$0xff]
  %v2251 = vld [vmem:[%s13 + $0x40] sm:$0xff]
  %v2252 = vld [vmem:[%s13 + $0x48] sm:$0xff]
  %v2253 = vld [vmem:[%s13 + $0x50] sm:$0xff]
  %v2254 = vld [vmem:[%s13 + $0x58] sm:$0xff]
  %v2255 = vld [vmem:[%s13 + $0x60] sm:$0xff]
  %v2256 = vld [vmem:[%s13 + $0x68] sm:$0xff]
  %v2257 = vld [vmem:[%s13 + $0x70] sm:$0xff]
  %v2258 = vld [vmem:[%s13 + $0x78] sm:$0xff]
  %v2259 = vld [vmem:[%s13 + $0x80] sm:$0xff]
  %v2260 = vld [vmem:[%s13 + $0x88] sm:$0xff]
  %v2261 = vld [vmem:[%s13 + $0x90] sm:$0xff]
  %v2262 = vld [vmem:[%s13 + $0x98] sm:$0xff]
  %v2263 = vld [vmem:[%s13 + $0xa0] sm:$0xff]
  %v2264 = vld [vmem:[%s13 + $0xa8] sm:$0xff]
  %v2265 = vld [vmem:[%s13 + $0xb0] sm:$0xff]
  %v2266 = vld [vmem:[%s13 + $0xb8] sm:$0xff]
  %v2267 = vld [vmem:[%s13 + $0xc0] sm:$0xff]
  %v2268 = vld [vmem:[%s13 + $0xc8] sm:$0xff]
  %v2269 = vld [vmem:[%s13 + $0xd0] sm:$0xff]
  %v2270 = vld [vmem:[%s13 + $0xd8] sm:$0xff]
  %v2271 = vld [vmem:[%s13 + $0xe0] sm:$0xff]
  %v2272 = vld [vmem:[%s13 + $0xe8] sm:$0xff]
  %v2273 = vld [vmem:[%s13 + $0xf0] sm:$0xff]
  %v2274 = vld [vmem:[%s13 + $0xf8] sm:$0xff]
  %v2275 = vld [vmem:[%s13 + $0x100] sm:$0xff]
  %v2276 = vld [vmem:[%s13 + $0x108] sm:$0xff]
  %v2277 = vld [vmem:[%s13 + $0x110] sm:$0xff]
  %v2278 = vld [vmem:[%s13 + $0x118] sm:$0xff]
  %v2279 = vld [vmem:[%s13 + $0x120] sm:$0xff]
  %v2280 = vld [vmem:[%s13 + $0x128] sm:$0xff]
  %v2281 = vld [vmem:[%s13 + $0x130] sm:$0xff]
  %v2282 = vld [vmem:[%s13 + $0x138] sm:$0xff]
  %v2283 = vld [vmem:[%s13 + $0x140] sm:$0xff]
  %v2284 = vld [vmem:[%s13 + $0x148] sm:$0xff]
  %v2285 = vld [vmem:[%s13 + $0x150] sm:$0xff]
  %v2286 = vld [vmem:[%s13 + $0x158] sm:$0xff]
  %v2287 = vld [vmem:[%s13 + $0x160] sm:$0xff]
  %v2288 = vld [vmem:[%s13 + $0x168] sm:$0xff]
  %v2289 = vld [vmem:[%s13 + $0x170] sm:$0xff]
  %v2290 = vld [vmem:[%s13 + $0x178] sm:$0xff]
  %v2291 = vld [vmem:[%s14] sm:$0xff]
  %v2292 = vld [vmem:[%s14 + $0x8] sm:$0xff]
  %v2293 = vld [vmem:[%s14 + $0x10] sm:$0xff]
  %v2294 = vld [vmem:[%s14 + $0x18] sm:$0xff]
  %v2295 = vld [vmem:[%s14 + $0x20] sm:$0xff]
  %v2296 = vld [vmem:[%s14 + $0x28] sm:$0xff]
  %v2297 = vld [vmem:[%s14 + $0x30] sm:$0xff]
  %v2298 = vld [vmem:[%s14 + $0x38] sm:$0xff]
  %v2299 = vld [vmem:[%s14 + $0x40] sm:$0xff]
  %v2300 = vld [vmem:[%s14 + $0x48] sm:$0xff]
  %v2301 = vld [vmem:[%s14 + $0x50] sm:$0xff]
  %v2302 = vld [vmem:[%s14 + $0x58] sm:$0xff]
  %v2303 = vld [vmem:[%s14 + $0x60] sm:$0xff]
  %v2304 = vld [vmem:[%s14 + $0x68] sm:$0xff]
  %v2305 = vld [vmem:[%s14 + $0x70] sm:$0xff]
  %v2306 = vld [vmem:[%s14 + $0x78] sm:$0xff]
  %v2323 = vunpack.c.l.b16 %v2291
  %v2324 = vunpack.c.h.b16 %v2291
  %v2325 = vunpack.c.l.b16 %v2292
  %v2326 = vunpack.c.h.b16 %v2292
  %v2327 = vunpack.c.l.b16 %v2293
  %v2328 = vunpack.c.h.b16 %v2293
  %v2329 = vunpack.c.l.b16 %v2294
  %v2330 = vunpack.c.h.b16 %v2294
  %v2331 = vunpack.c.l.b16 %v2295
  %v2332 = vunpack.c.h.b16 %v2295
  %v2333 = vunpack.c.l.b16 %v2296
  %v2334 = vunpack.c.h.b16 %v2296
  %v2335 = vunpack.c.l.b16 %v2297
  %v2336 = vunpack.c.h.b16 %v2297
  %v2337 = vunpack.c.l.b16 %v2298
  %v2338 = vunpack.c.h.b16 %v2298
  %v2339 = vunpack.c.l.b16 %v2299
  %v2340 = vunpack.c.h.b16 %v2299
  %v2341 = vunpack.c.l.b16 %v2300
  %v2342 = vunpack.c.h.b16 %v2300
  %v2343 = vunpack.c.l.b16 %v2301
  %v2344 = vunpack.c.h.b16 %v2301
  %v2345 = vunpack.c.l.b16 %v2302
  %v2346 = vunpack.c.h.b16 %v2302
  %v2347 = vunpack.c.l.b16 %v2303
  %v2348 = vunpack.c.h.b16 %v2303
  %v2349 = vunpack.c.l.b16 %v2304
  %v2350 = vunpack.c.h.b16 %v2304
  %v2351 = vunpack.c.l.b16 %v2305
  %v2352 = vunpack.c.h.b16 %v2305
  %v2353 = vunpack.c.l.b16 %v2306
  %v2354 = vunpack.c.h.b16 %v2306
  %v2355 = vpack.c.b16 %v2325, %v2323
  %v2356 = vpack.c.b16 %v2326, %v2324
  %v2357 = vpack.c.b16 %v2329, %v2327
  %v2358 = vpack.c.b16 %v2330, %v2328
  %v2359 = vpack.c.b16 %v2333, %v2331
  %v2360 = vpack.c.b16 %v2334, %v2332
  %v2361 = vpack.c.b16 %v2337, %v2335
  %v2362 = vpack.c.b16 %v2338, %v2336
  %v2363 = vpack.c.b16 %v2341, %v2339
  %v2364 = vpack.c.b16 %v2342, %v2340
  %v2365 = vpack.c.b16 %v2345, %v2343
  %v2366 = vpack.c.b16 %v2346, %v2344
  %v2367 = vpack.c.b16 %v2349, %v2347
  %v2368 = vpack.c.b16 %v2350, %v2348
  %v2369 = vpack.c.b16 %v2353, %v2351
  %v2370 = vpack.c.b16 %v2354, %v2352
  %2387 = vmatprep.subr.bf16.mxu0 %v2356
  %2388 = vmatpush1.bf16.msra.mxu0 %v2355
  %2389 = vmatprep.subr.bf16.mxu0 %v2358
  %2390 = vmatpush1.bf16.msra.mxu0 %v2357
  %2391 = vmatprep.subr.bf16.mxu0 %v2360
  %2392 = vmatpush1.bf16.msra.mxu0 %v2359
  %2393 = vmatprep.subr.bf16.mxu0 %v2362
  %2394 = vmatpush1.bf16.msra.mxu0 %v2361
  %2395 = vmatprep.subr.bf16.mxu0 %v2364
  %2396 = vmatpush1.bf16.msra.mxu0 %v2363
  %2397 = vmatprep.subr.bf16.mxu0 %v2366
  %2398 = vmatpush1.bf16.msra.mxu0 %v2365
  %2399 = vmatprep.subr.bf16.mxu0 %v2368
  %2400 = vmatpush1.bf16.msra.mxu0 %v2367
  %2401 = vmatprep.subr.bf16.mxu0 %v2370
  %2402 = vmatpush1.bf16.msra.mxu0 %v2369
  %2403 = vmatprep.subr.bf16.mxu0 0
  %2404 = vmatpush1.bf16.msra.mxu0 0
  %2405 = vmatprep.subr.bf16.mxu0 0
  %2406 = vmatpush1.bf16.msra.mxu0 0
  %2407 = vmatprep.subr.bf16.mxu0 0
  %2408 = vmatpush1.bf16.msra.mxu0 0
  %2409 = vmatprep.subr.bf16.mxu0 0
  %2410 = vmatpush1.bf16.msra.mxu0 0
  %2411 = vmatprep.subr.bf16.mxu0 0
  %2412 = vmatpush1.bf16.msra.mxu0 0
  %2413 = vmatprep.subr.bf16.mxu0 0
  %2414 = vmatpush1.bf16.msra.mxu0 0
  %2415 = vmatprep.subr.bf16.mxu0 0
  %2416 = vmatpush1.bf16.msra.mxu0 0
  %2417 = vmatprep.subr.bf16.mxu0 0
  %2418 = vmatpush1.bf16.msra.mxu0 0
  %2419 = vmatprep.mubr.bf16.mxu0 0
  %2420 = vmatmul.mubr.bf16.gmra.mrb[0].mxu0 %v1317
  %v2421 = vpop.f32.mrb[0].mxu0
  %v2422 = vadd.f32 0.0, %v2421
  %v2423 = vpop.f32.mrb[0].mxu0
  %v2424 = vadd.f32 0.0, %v2423
  %v2425 = vpop.f32.mrb[0].mxu0
  %v2426 = vpop.f32.mrb[0].mxu0
  %2427 = vdwg.mxu0
  %v2476 = vunpack.c.l.b16 %v2243
  %v2477 = vunpack.c.h.b16 %v2243
  %v2478 = vunpack.c.l.b16 %v2244
  %v2479 = vunpack.c.h.b16 %v2244
  %v2480 = vunpack.c.l.b16 %v2245
  %v2481 = vunpack.c.h.b16 %v2245
  %v2482 = vunpack.c.l.b16 %v2246
  %v2483 = vunpack.c.h.b16 %v2246
  %v2484 = vunpack.c.l.b16 %v2247
  %v2485 = vunpack.c.h.b16 %v2247
  %v2486 = vunpack.c.l.b16 %v2248
  %v2487 = vunpack.c.h.b16 %v2248
  %v2488 = vunpack.c.l.b16 %v2249
  %v2489 = vunpack.c.h.b16 %v2249
  %v2490 = vunpack.c.l.b16 %v2250
  %v2491 = vunpack.c.h.b16 %v2250
  %v2492 = vunpack.c.l.b16 %v2251
  %v2493 = vunpack.c.h.b16 %v2251
  %v2494 = vunpack.c.l.b16 %v2252
  %v2495 = vunpack.c.h.b16 %v2252
  %v2496 = vunpack.c.l.b16 %v2253
  %v2497 = vunpack.c.h.b16 %v2253
  %v2498 = vunpack.c.l.b16 %v2254
  %v2499 = vunpack.c.h.b16 %v2254
  %v2500 = vunpack.c.l.b16 %v2255
  %v2501 = vunpack.c.h.b16 %v2255
  %v2502 = vunpack.c.l.b16 %v2256
  %v2503 = vunpack.c.h.b16 %v2256
  %v2504 = vunpack.c.l.b16 %v2257
  %v2505 = vunpack.c.h.b16 %v2257
  %v2506 = vunpack.c.l.b16 %v2258
  %v2507 = vunpack.c.h.b16 %v2258
  %v2508 = vunpack.c.l.b16 %v2259
  %v2509 = vunpack.c.h.b16 %v2259
  %v2510 = vunpack.c.l.b16 %v2260
  %v2511 = vunpack.c.h.b16 %v2260
  %v2512 = vunpack.c.l.b16 %v2261
  %v2513 = vunpack.c.h.b16 %v2261
  %v2514 = vunpack.c.l.b16 %v2262
  %v2515 = vunpack.c.h.b16 %v2262
  %v2516 = vunpack.c.l.b16 %v2263
  %v2517 = vunpack.c.h.b16 %v2263
  %v2518 = vunpack.c.l.b16 %v2264
  %v2519 = vunpack.c.h.b16 %v2264
  %v2520 = vunpack.c.l.b16 %v2265
  %v2521 = vunpack.c.h.b16 %v2265
  %v2522 = vunpack.c.l.b16 %v2266
  %v2523 = vunpack.c.h.b16 %v2266
  %v2524 = vunpack.c.l.b16 %v2267
  %v2525 = vunpack.c.h.b16 %v2267
  %v2526 = vunpack.c.l.b16 %v2268
  %v2527 = vunpack.c.h.b16 %v2268
  %v2528 = vunpack.c.l.b16 %v2269
  %v2529 = vunpack.c.h.b16 %v2269
  %v2530 = vunpack.c.l.b16 %v2270
  %v2531 = vunpack.c.h.b16 %v2270
  %v2532 = vunpack.c.l.b16 %v2271
  %v2533 = vunpack.c.h.b16 %v2271
  %v2534 = vunpack.c.l.b16 %v2272
  %v2535 = vunpack.c.h.b16 %v2272
  %v2536 = vunpack.c.l.b16 %v2273
  %v2537 = vunpack.c.h.b16 %v2273
  %v2538 = vunpack.c.l.b16 %v2274
  %v2539 = vunpack.c.h.b16 %v2274
  %v2540 = vunpack.c.l.b16 %v2275
  %v2541 = vunpack.c.h.b16 %v2275
  %v2542 = vunpack.c.l.b16 %v2276
  %v2543 = vunpack.c.h.b16 %v2276
  %v2544 = vunpack.c.l.b16 %v2277
  %v2545 = vunpack.c.h.b16 %v2277
  %v2546 = vunpack.c.l.b16 %v2278
  %v2547 = vunpack.c.h.b16 %v2278
  %v2548 = vunpack.c.l.b16 %v2279
  %v2549 = vunpack.c.h.b16 %v2279
  %v2550 = vunpack.c.l.b16 %v2280
  %v2551 = vunpack.c.h.b16 %v2280
  %v2552 = vunpack.c.l.b16 %v2281
  %v2553 = vunpack.c.h.b16 %v2281
  %v2554 = vunpack.c.l.b16 %v2282
  %v2555 = vunpack.c.h.b16 %v2282
  %v2556 = vunpack.c.l.b16 %v2283
  %v2557 = vunpack.c.h.b16 %v2283
  %v2558 = vunpack.c.l.b16 %v2284
  %v2559 = vunpack.c.h.b16 %v2284
  %v2560 = vunpack.c.l.b16 %v2285
  %v2561 = vunpack.c.h.b16 %v2285
  %v2562 = vunpack.c.l.b16 %v2286
  %v2563 = vunpack.c.h.b16 %v2286
  %v2564 = vunpack.c.l.b16 %v2287
  %v2565 = vunpack.c.h.b16 %v2287
  %v2566 = vunpack.c.l.b16 %v2288
  %v2567 = vunpack.c.h.b16 %v2288
  %v2568 = vunpack.c.l.b16 %v2289
  %v2569 = vunpack.c.h.b16 %v2289
  %v2570 = vunpack.c.l.b16 %v2290
  %v2571 = vunpack.c.h.b16 %v2290
  %v2572 = vpack.c.b16 %v2478, %v2476
  %v2573 = vpack.c.b16 %v2479, %v2477
  %v2574 = vpack.c.b16 %v2482, %v2480
  %v2575 = vpack.c.b16 %v2483, %v2481
  %v2576 = vpack.c.b16 %v2486, %v2484
  %v2577 = vpack.c.b16 %v2487, %v2485
  %v2578 = vpack.c.b16 %v2490, %v2488
  %v2579 = vpack.c.b16 %v2491, %v2489
  %v2580 = vpack.c.b16 %v2494, %v2492
  %v2581 = vpack.c.b16 %v2495, %v2493
  %v2582 = vpack.c.b16 %v2498, %v2496
  %v2583 = vpack.c.b16 %v2499, %v2497
  %v2584 = vpack.c.b16 %v2502, %v2500
  %v2585 = vpack.c.b16 %v2503, %v2501
  %v2586 = vpack.c.b16 %v2506, %v2504
  %v2587 = vpack.c.b16 %v2507, %v2505
  %v2588 = vpack.c.b16 %v2510, %v2508
  %v2589 = vpack.c.b16 %v2511, %v2509
  %v2590 = vpack.c.b16 %v2514, %v2512
  %v2591 = vpack.c.b16 %v2515, %v2513
  %v2592 = vpack.c.b16 %v2518, %v2516
  %v2593 = vpack.c.b16 %v2519, %v2517
  %v2594 = vpack.c.b16 %v2522, %v2520
  %v2595 = vpack.c.b16 %v2523, %v2521
  %v2596 = vpack.c.b16 %v2526, %v2524
  %v2597 = vpack.c.b16 %v2527, %v2525
  %v2598 = vpack.c.b16 %v2530, %v2528
  %v2599 = vpack.c.b16 %v2531, %v2529
  %v2600 = vpack.c.b16 %v2534, %v2532
  %v2601 = vpack.c.b16 %v2535, %v2533
  %v2602 = vpack.c.b16 %v2538, %v2536
  %v2603 = vpack.c.b16 %v2539, %v2537
  %v2604 = vpack.c.b16 %v2542, %v2540
  %v2605 = vpack.c.b16 %v2543, %v2541
  %v2606 = vpack.c.b16 %v2546, %v2544
  %v2607 = vpack.c.b16 %v2547, %v2545
  %v2608 = vpack.c.b16 %v2550, %v2548
  %v2609 = vpack.c.b16 %v2551, %v2549
  %v2610 = vpack.c.b16 %v2554, %v2552
  %v2611 = vpack.c.b16 %v2555, %v2553
  %v2612 = vpack.c.b16 %v2558, %v2556
  %v2613 = vpack.c.b16 %v2559, %v2557
  %v2614 = vpack.c.b16 %v2562, %v2560
  %v2615 = vpack.c.b16 %v2563, %v2561
  %v2616 = vpack.c.b16 %v2566, %v2564
  %v2617 = vpack.c.b16 %v2567, %v2565
  %v2618 = vpack.c.b16 %v2570, %v2568
  %v2619 = vpack.c.b16 %v2571, %v2569
  %2668 = vmatprep.subr.bf16.mxu0 %v2573
  %2669 = vmatpush1.bf16.msra.mxu0 %v2572
  %2670 = vmatprep.subr.bf16.mxu0 %v2575
  %2671 = vmatpush1.bf16.msra.mxu0 %v2574
  %2672 = vmatprep.subr.bf16.mxu0 %v2577
  %2673 = vmatpush1.bf16.msra.mxu0 %v2576
  %2674 = vmatprep.subr.bf16.mxu0 %v2579
  %2675 = vmatpush1.bf16.msra.mxu0 %v2578
  %2676 = vmatprep.subr.bf16.mxu0 %v2581
  %2677 = vmatpush1.bf16.msra.mxu0 %v2580
  %2678 = vmatprep.subr.bf16.mxu0 %v2583
  %2679 = vmatpush1.bf16.msra.mxu0 %v2582
  %2680 = vmatprep.subr.bf16.mxu0 %v2585
  %2681 = vmatpush1.bf16.msra.mxu0 %v2584
  %2682 = vmatprep.subr.bf16.mxu0 %v2587
  %2683 = vmatpush1.bf16.msra.mxu0 %v2586
  %2684 = vmatprep.subr.bf16.mxu0 %v2589
  %2685 = vmatpush1.bf16.msra.mxu0 %v2588
  %2686 = vmatprep.subr.bf16.mxu0 %v2591
  %2687 = vmatpush1.bf16.msra.mxu0 %v2590
  %2688 = vmatprep.subr.bf16.mxu0 %v2593
  %2689 = vmatpush1.bf16.msra.mxu0 %v2592
  %2690 = vmatprep.subr.bf16.mxu0 %v2595
  %2691 = vmatpush1.bf16.msra.mxu0 %v2594
  %2692 = vmatprep.subr.bf16.mxu0 %v2597
  %2693 = vmatpush1.bf16.msra.mxu0 %v2596
  %2694 = vmatprep.subr.bf16.mxu0 %v2599
  %2695 = vmatpush1.bf16.msra.mxu0 %v2598
  %2696 = vmatprep.subr.bf16.mxu0 %v2601
  %2697 = vmatpush1.bf16.msra.mxu0 %v2600
  %2698 = vmatprep.subr.bf16.mxu0 %v2603
  %2699 = vmatpush1.bf16.msra.mxu0 %v2602
  %2700 = vmatprep.mubr.bf16.mxu0 %v2240
  %2701 = vmatmul.mubr.bf16.gmra.mrb[0].mxu0 %v2239
  %v2702 = vpop.f32.mrb[0].mxu0
  %v2703 = vadd.f32 %v2422, %v2702
  %v2704 = vpop.f32.mrb[0].mxu0
  %v2705 = vadd.f32 %v2424, %v2704
  %v2706 = vpop.f32.mrb[0].mxu0
  %v2707 = vpop.f32.mrb[0].mxu0
  %2708 = vdwg.mxu0
  %2709 = vmatprep.subr.bf16.mxu0 %v2605
  %2710 = vmatpush1.bf16.msra.mxu0 %v2604
  %2711 = vmatprep.subr.bf16.mxu0 %v2607
  %2712 = vmatpush1.bf16.msra.mxu0 %v2606
  %2713 = vmatprep.subr.bf16.mxu0 %v2609
  %2714 = vmatpush1.bf16.msra.mxu0 %v2608
  %2715 = vmatprep.subr.bf16.mxu0 %v2611
  %2716 = vmatpush1.bf16.msra.mxu0 %v2610
  %2717 = vmatprep.subr.bf16.mxu0 %v2613
  %2718 = vmatpush1.bf16.msra.mxu0 %v2612
  %2719 = vmatprep.subr.bf16.mxu0 %v2615
  %2720 = vmatpush1.bf16.msra.mxu0 %v2614
  %2721 = vmatprep.subr.bf16.mxu0 %v2617
  %2722 = vmatpush1.bf16.msra.mxu0 %v2616
  %2723 = vmatprep.subr.bf16.mxu0 %v2619
  %2724 = vmatpush1.bf16.msra.mxu0 %v2618
  %2725 = vmatprep.subr.bf16.mxu0 0
  %2726 = vmatpush1.bf16.msra.mxu0 0
  %2727 = vmatprep.subr.bf16.mxu0 0
  %2728 = vmatpush1.bf16.msra.mxu0 0
  %2729 = vmatprep.subr.bf16.mxu0 0
  %2730 = vmatpush1.bf16.msra.mxu0 0
  %2731 = vmatprep.subr.bf16.mxu0 0
  %2732 = vmatpush1.bf16.msra.mxu0 0
  %2733 = vmatprep.subr.bf16.mxu0 0
  %2734 = vmatpush1.bf16.msra.mxu0 0
  %2735 = vmatprep.subr.bf16.mxu0 0
  %2736 = vmatpush1.bf16.msra.mxu0 0
  %2737 = vmatprep.subr.bf16.mxu0 0
  %2738 = vmatpush1.bf16.msra.mxu0 0
  %2739 = vmatprep.subr.bf16.mxu0 0
  %2740 = vmatpush1.bf16.msra.mxu0 0
  %2741 = vmatprep.mubr.bf16.mxu0 0
  %2742 = vmatmul.mubr.bf16.gmra.mrb[0].mxu0 %v2241
  %v2743 = vpop.f32.mrb[0].mxu0
  %v2744 = vadd.f32 %v2703, %v2743
  %v2745 = vpop.f32.mrb[0].mxu0
  %v2746 = vadd.f32 %v2705, %v2745
  %v2747 = vpop.f32.mrb[0].mxu0
  %v2748 = vpop.f32.mrb[0].mxu0
  %2749 = vdwg.mxu0
  %v2750 = vld [vmem:[%s15] sm:$0x3]
  %2752 = vset.pattern.permute.xlu0 0
  %2753 = vperm.xlu0 %2752, %v2242
  %v2754 = vpop.permute.xlu0 %2753
  %v2757 = vlaneseq
  %v2758 = vshrl.u32 %v2757, 7
  %v2759 = vsub.s32 0, %v2758
  %v2760 = vrot.slane %v2750, %v2759
  %v2761 = vlaneseq
  %v2762 = vshrl.u32 %v2761, 7
  %v2763 = vsub.s32 1, %v2762
  %v2764 = vrot.slane %v2750, %v2763
  %v2767 = vmul.f32 %v2754, %v2760
  %v2768 = vmul.f32 %v2754, %v2764
  %v2769 = vadd.f32 %v2744, %v2767
  %v2770 = vadd.f32 %v2746, %v2768
  %v2771 = vld [vmem:[%s16] sm:$0x3]
  %v2773 = vlaneseq
  %v2774 = vshrl.u32 %v2773, 7
  %v2775 = vsub.s32 0, %v2774
  %v2776 = vrot.slane %v2771, %v2775
  %v2777 = vlaneseq
  %v2778 = vshrl.u32 %v2777, 7
  %v2779 = vsub.s32 1, %v2778
  %v2780 = vrot.slane %v2771, %v2779
  %v2783 = vadd.f32 %v2769, %v2776
  %v2784 = vadd.f32 %v2770, %v2780
  %v2785 = vtanh.pop %v2783
  %v2786 = vtanh.pop %v2784
  %v2787 = vpack.c.bf16 %v2785, %v2785
  %v2788 = vpack.c.bf16 %v2786, %v2786
  %v2789 = vld [vmem:[%s17] sm:$0xff]
  %v2790 = vld [vmem:[%s17 + $0x8] sm:$0xff]
  %v2791 = vld [vmem:[%s17 + $0x10] sm:$0xff]
  %v2792 = vld [vmem:[%s17 + $0x18] sm:$0xff]
  %v2793 = vld [vmem:[%s17 + $0x20] sm:$0xff]
  %v2794 = vld [vmem:[%s17 + $0x28] sm:$0xff]
  %v2795 = vld [vmem:[%s17 + $0x30] sm:$0xff]
  %v2796 = vld [vmem:[%s17 + $0x38] sm:$0xff]
  %v2797 = vld [vmem:[%s17 + $0x40] sm:$0xff]
  %v2798 = vld [vmem:[%s17 + $0x48] sm:$0xff]
  %v2799 = vld [vmem:[%s17 + $0x50] sm:$0xff]
  %v2800 = vld [vmem:[%s17 + $0x58] sm:$0xff]
  %v2801 = vld [vmem:[%s17 + $0x60] sm:$0xff]
  %v2802 = vld [vmem:[%s17 + $0x68] sm:$0xff]
  %v2803 = vld [vmem:[%s17 + $0x70] sm:$0xff]
  %v2804 = vld [vmem:[%s17 + $0x78] sm:$0xff]
  %v2805 = vld [vmem:[%s17 + $0x80] sm:$0xff]
  %v2806 = vld [vmem:[%s17 + $0x88] sm:$0xff]
  %v2807 = vld [vmem:[%s17 + $0x90] sm:$0xff]
  %v2808 = vld [vmem:[%s17 + $0x98] sm:$0xff]
  %v2809 = vld [vmem:[%s17 + $0xa0] sm:$0xff]
  %v2810 = vld [vmem:[%s17 + $0xa8] sm:$0xff]
  %v2811 = vld [vmem:[%s17 + $0xb0] sm:$0xff]
  %v2812 = vld [vmem:[%s17 + $0xb8] sm:$0xff]
  %v2813 = vld [vmem:[%s17 + $0xc0] sm:$0xff]
  %v2814 = vld [vmem:[%s17 + $0xc8] sm:$0xff]
  %v2815 = vld [vmem:[%s17 + $0xd0] sm:$0xff]
  %v2816 = vld [vmem:[%s17 + $0xd8] sm:$0xff]
  %v2817 = vld [vmem:[%s17 + $0xe0] sm:$0xff]
  %v2818 = vld [vmem:[%s17 + $0xe8] sm:$0xff]
  %v2819 = vld [vmem:[%s17 + $0xf0] sm:$0xff]
  %v2820 = vld [vmem:[%s17 + $0xf8] sm:$0xff]
  %v2821 = vld [vmem:[%s18] sm:$0x3]
  %v2823 = vlaneseq
  %v2824 = vshrl.u32 %v2823, 7
  %v2825 = vsub.s32 0, %v2824
  %v2826 = vrot.slane %v2821, %v2825
  %v2827 = vlaneseq
  %v2828 = vshrl.u32 %v2827, 7
  %v2829 = vsub.s32 1, %v2828
  %v2830 = vrot.slane %v2821, %v2829
  %v2865 = vunpack.c.l.b16 %v2789
  %v2866 = vunpack.c.h.b16 %v2789
  %v2867 = vunpack.c.l.b16 %v2790
  %v2868 = vunpack.c.h.b16 %v2790
  %v2869 = vunpack.c.l.b16 %v2791
  %v2870 = vunpack.c.h.b16 %v2791
  %v2871 = vunpack.c.l.b16 %v2792
  %v2872 = vunpack.c.h.b16 %v2792
  %v2873 = vunpack.c.l.b16 %v2793
  %v2874 = vunpack.c.h.b16 %v2793
  %v2875 = vunpack.c.l.b16 %v2794
  %v2876 = vunpack.c.h.b16 %v2794
  %v2877 = vunpack.c.l.b16 %v2795
  %v2878 = vunpack.c.h.b16 %v2795
  %v2879 = vunpack.c.l.b16 %v2796
  %v2880 = vunpack.c.h.b16 %v2796
  %v2881 = vunpack.c.l.b16 %v2797
  %v2882 = vunpack.c.h.b16 %v2797
  %v2883 = vunpack.c.l.b16 %v2798
  %v2884 = vunpack.c.h.b16 %v2798
  %v2885 = vunpack.c.l.b16 %v2799
  %v2886 = vunpack.c.h.b16 %v2799
  %v2887 = vunpack.c.l.b16 %v2800
  %v2888 = vunpack.c.h.b16 %v2800
  %v2889 = vunpack.c.l.b16 %v2801
  %v2890 = vunpack.c.h.b16 %v2801
  %v2891 = vunpack.c.l.b16 %v2802
  %v2892 = vunpack.c.h.b16 %v2802
  %v2893 = vunpack.c.l.b16 %v2803
  %v2894 = vunpack.c.h.b16 %v2803
  %v2895 = vunpack.c.l.b16 %v2804
  %v2896 = vunpack.c.h.b16 %v2804
  %v2897 = vunpack.c.l.b16 %v2805
  %v2898 = vunpack.c.h.b16 %v2805
  %v2899 = vunpack.c.l.b16 %v2806
  %v2900 = vunpack.c.h.b16 %v2806
  %v2901 = vunpack.c.l.b16 %v2807
  %v2902 = vunpack.c.h.b16 %v2807
  %v2903 = vunpack.c.l.b16 %v2808
  %v2904 = vunpack.c.h.b16 %v2808
  %v2905 = vunpack.c.l.b16 %v2809
  %v2906 = vunpack.c.h.b16 %v2809
  %v2907 = vunpack.c.l.b16 %v2810
  %v2908 = vunpack.c.h.b16 %v2810
  %v2909 = vunpack.c.l.b16 %v2811
  %v2910 = vunpack.c.h.b16 %v2811
  %v2911 = vunpack.c.l.b16 %v2812
  %v2912 = vunpack.c.h.b16 %v2812
  %v2913 = vunpack.c.l.b16 %v2813
  %v2914 = vunpack.c.h.b16 %v2813
  %v2915 = vunpack.c.l.b16 %v2814
  %v2916 = vunpack.c.h.b16 %v2814
  %v2917 = vunpack.c.l.b16 %v2815
  %v2918 = vunpack.c.h.b16 %v2815
  %v2919 = vunpack.c.l.b16 %v2816
  %v2920 = vunpack.c.h.b16 %v2816
  %v2921 = vunpack.c.l.b16 %v2817
  %v2922 = vunpack.c.h.b16 %v2817
  %v2923 = vunpack.c.l.b16 %v2818
  %v2924 = vunpack.c.h.b16 %v2818
  %v2925 = vunpack.c.l.b16 %v2819
  %v2926 = vunpack.c.h.b16 %v2819
  %v2927 = vunpack.c.l.b16 %v2820
  %v2928 = vunpack.c.h.b16 %v2820
  %v2929 = vpack.c.b16 %v2867, %v2865
  %v2930 = vpack.c.b16 %v2868, %v2866
  %v2931 = vpack.c.b16 %v2871, %v2869
  %v2932 = vpack.c.b16 %v2872, %v2870
  %v2933 = vpack.c.b16 %v2875, %v2873
  %v2934 = vpack.c.b16 %v2876, %v2874
  %v2935 = vpack.c.b16 %v2879, %v2877
  %v2936 = vpack.c.b16 %v2880, %v2878
  %v2937 = vpack.c.b16 %v2883, %v2881
  %v2938 = vpack.c.b16 %v2884, %v2882
  %v2939 = vpack.c.b16 %v2887, %v2885
  %v2940 = vpack.c.b16 %v2888, %v2886
  %v2941 = vpack.c.b16 %v2891, %v2889
  %v2942 = vpack.c.b16 %v2892, %v2890
  %v2943 = vpack.c.b16 %v2895, %v2893
  %v2944 = vpack.c.b16 %v2896, %v2894
  %v2945 = vpack.c.b16 %v2899, %v2897
  %v2946 = vpack.c.b16 %v2900, %v2898
  %v2947 = vpack.c.b16 %v2903, %v2901
  %v2948 = vpack.c.b16 %v2904, %v2902
  %v2949 = vpack.c.b16 %v2907, %v2905
  %v2950 = vpack.c.b16 %v2908, %v2906
  %v2951 = vpack.c.b16 %v2911, %v2909
  %v2952 = vpack.c.b16 %v2912, %v2910
  %v2953 = vpack.c.b16 %v2915, %v2913
  %v2954 = vpack.c.b16 %v2916, %v2914
  %v2955 = vpack.c.b16 %v2919, %v2917
  %v2956 = vpack.c.b16 %v2920, %v2918
  %v2957 = vpack.c.b16 %v2923, %v2921
  %v2958 = vpack.c.b16 %v2924, %v2922
  %v2959 = vpack.c.b16 %v2927, %v2925
  %v2960 = vpack.c.b16 %v2928, %v2926
  %2993 = vmatprep.subr.bf16.mxu0 %v2930
  %2994 = vmatpush1.bf16.msra.mxu0 %v2929
  %2995 = vmatprep.subr.bf16.mxu0 %v2932
  %2996 = vmatpush1.bf16.msra.mxu0 %v2931
  %2997 = vmatprep.subr.bf16.mxu0 %v2934
  %2998 = vmatpush1.bf16.msra.mxu0 %v2933
  %2999 = vmatprep.subr.bf16.mxu0 %v2936
  %3000 = vmatpush1.bf16.msra.mxu0 %v2935
  %3001 = vmatprep.subr.bf16.mxu0 %v2938
  %3002 = vmatpush1.bf16.msra.mxu0 %v2937
  %3003 = vmatprep.subr.bf16.mxu0 %v2940
  %3004 = vmatpush1.bf16.msra.mxu0 %v2939
  %3005 = vmatprep.subr.bf16.mxu0 %v2942
  %3006 = vmatpush1.bf16.msra.mxu0 %v2941
  %3007 = vmatprep.subr.bf16.mxu0 %v2944
  %3008 = vmatpush1.bf16.msra.mxu0 %v2943
  %3009 = vmatprep.subr.bf16.mxu0 %v2946
  %3010 = vmatpush1.bf16.msra.mxu0 %v2945
  %3011 = vmatprep.subr.bf16.mxu0 %v2948
  %3012 = vmatpush1.bf16.msra.mxu0 %v2947
  %3013 = vmatprep.subr.bf16.mxu0 %v2950
  %3014 = vmatpush1.bf16.msra.mxu0 %v2949
  %3015 = vmatprep.subr.bf16.mxu0 %v2952
  %3016 = vmatpush1.bf16.msra.mxu0 %v2951
  %3017 = vmatprep.subr.bf16.mxu0 %v2954
  %3018 = vmatpush1.bf16.msra.mxu0 %v2953
  %3019 = vmatprep.subr.bf16.mxu0 %v2956
  %3020 = vmatpush1.bf16.msra.mxu0 %v2955
  %3021 = vmatprep.subr.bf16.mxu0 %v2958
  %3022 = vmatpush1.bf16.msra.mxu0 %v2957
  %3023 = vmatprep.subr.bf16.mxu0 %v2960
  %3024 = vmatpush1.bf16.msra.mxu0 %v2959
  %3025 = vmatprep.mubr.bf16.mxu0 %v2788
  %3026 = vmatmul.mubr.bf16.gmra.mrb[0].mxu0 %v2787
  %v3027 = vpop.f32.mrb[0].mxu0
  %v3028 = vadd.f32 %v2826, %v3027
  %v3029 = vpop.f32.mrb[0].mxu0
  %v3030 = vadd.f32 %v2830, %v3029
  %v3031 = vpop.f32.mrb[0].mxu0
  %v3032 = vpop.f32.mrb[0].mxu0
  %3033 = vdwg.mxu0
  %3034 = vmax.xlane.f32.xlu0 %v3028
  %v3035 = vpop.xlane.xlu0 %3034
  %v3036 = vsub.f32 %v3028, %v3035
  %v3037 = vmul.f32 %v3036, 1.442695
  %v3038 = vpow.pop %v3037
  %3039 = vadd.xlane.f32.xlu0 %v3038
  %v3040 = vpop.xlane.xlu0 %3039
  %v3041 = vlog2.pop %v3040
  %v3042 = vmul.f32 %v3041, 0.6931472
  %v3043 = vadd.f32 %v3035, %v3042
  %v3044 = vsub.f32 %v3028, %v3043
  %3045 = vst [vmem:[%s19] sm:$0xff] %v3044
  %3046 = vst [vmem:[%s20] sm:$0xff] %v3030
  // Predicated region
  $region78: #{rec_ac_forward.1} parent=0 // pred_check
    _
  $region79: #{rec_ac_forward.1} parent=0 // pred_check_branch
    %3048 = sbr.rel (0) target = $region81
  $region80: #{rec_ac_forward.1} parent=0 // pred_region
    _
  $region81: #{rec_ac_forward.1} parent=0 // pred_fallthru
    _
  // Predicated region
  $region82: #{rec_ac_forward.1} parent=0 // pred_check
    _
  $region83: #{rec_ac_forward.1} parent=0 // pred_check_branch
    %3050 = sbr.rel (0) target = $region85
  $region84: #{rec_ac_forward.1} parent=0 // pred_region
    _
  $region85: #{rec_ac_forward.1} parent=0 // pred_fallthru
    _
  // Predicated region
  $region86: #{rec_ac_forward.1} parent=0 // pred_check
    _
  $region87: #{rec_ac_forward.1} parent=0 // pred_check_branch
    %3052 = sbr.rel (0) target = $region89
  $region88: #{rec_ac_forward.1} parent=0 // pred_region
    _
  $region89: #{rec_ac_forward.1} parent=0 // pred_fallthru
    _
  // Predicated region
  $region90: #{rec_ac_forward.1} parent=0 // pred_check
    _
  $region91: #{rec_ac_forward.1} parent=0 // pred_check_branch
    %3054 = sbr.rel (0) target = $region93
  $region92: #{rec_ac_forward.1} parent=0 // pred_region
    _
  $region93: #{rec_ac_forward.1} parent=0 // pred_fallthru
    _
  // Predicated region
  $region94: #{rec_ac_forward.1} parent=0 // pred_check
    _
  $region95: #{rec_ac_forward.1} parent=0 // pred_check_branch
    %3056 = sbr.rel (0) target = $region97
  $region96: #{rec_ac_forward.1} parent=0 // pred_region
    _
  $region97: #{rec_ac_forward.1} parent=0 // pred_fallthru
    _
  // Predicated region
  $region98: #{rec_ac_forward.1} parent=0 // pred_check
    _
  $region99: #{rec_ac_forward.1} parent=0 // pred_check_branch
    %3058 = sbr.rel (0) target = $region101
  $region100: #{rec_ac_forward.1} parent=0 // pred_region
    _
  $region101: #{rec_ac_forward.1} parent=0 // pred_fallthru
    _

</llo_original>
